<compile_context>
chip_gen: v6e
topology: v6e:2x2x1
jax: 0.10.0
libtpu: 0.0.40
codegen_flags: <defaults>
</compile_context>

<pallas_src>
import math

import jax
import jax.numpy as jnp
from jax.experimental import pallas as pl
from jax.experimental.pallas import tpu as pltpu

# ---- model hyperparameters (small, consistent with the module) ----
BATCH = 2
SEQ_LEN = 8
HIDDEN = 32
NUM_HEADS = 4
D_HEAD = HIDDEN // NUM_HEADS
LN_EPS = 1e-12
FIX_ATTENTION_RESIDUAL = False  # RibonanzaNetConfig default -> two residual LayerNorms


def _layer_norm(y, w, b):
    # keep the two-pass variance: with eps=1e-12 a fused E[x^2]-mu^2 can go negative
    mu = jnp.mean(y, axis=-1, keepdims=True)
    var = jnp.mean(jnp.square(y - mu), axis=-1, keepdims=True)
    return (y - mu) * jax.lax.rsqrt(var + LN_EPS) * w + b


def attention_kernel(x_ref, wqkv_ref, wo_ref,
                     ln1_w_ref, ln1_b_ref, ln2_w_ref, ln2_b_ref,
                     out_ref):
    x = x_ref[...]                                          # (B, L, H)

    # Fused Q|K|V projection: one batched matmul, N = 3H (better MXU occupancy
    # than three N=H pushes).
    qkv = jnp.einsum("ble,bef->blf", x, wqkv_ref[...],
                     preferred_element_type=jnp.float32)    # (B, L, 3H)

    scale = 1.0 / math.sqrt(D_HEAD)
    ctx_heads = []
    for h in range(NUM_HEADS):                              # static unroll (4 heads)
        q_h = qkv[:, :, h * D_HEAD:(h + 1) * D_HEAD]                              # (B, L, dH)
        k_h = qkv[:, :, HIDDEN + h * D_HEAD:HIDDEN + (h + 1) * D_HEAD]            # (B, L, dH)
        v_h = qkv[:, :, 2 * HIDDEN + h * D_HEAD:2 * HIDDEN + (h + 1) * D_HEAD]    # (B, L, dH)

        # Q.K^T via contraction of the last dims -- no transpose materialized.
        s = jnp.einsum("bqd,bkd->bqk", q_h, k_h,
                       preferred_element_type=jnp.float32) * scale                # (B, L, L)
        s = s - jnp.max(s, axis=-1, keepdims=True)
        e = jnp.exp(s)
        p = e * pl.reciprocal(jnp.sum(e, axis=-1, keepdims=True), approx=True)
        # dropout(attention_probs) -> identity in eval mode
        ctx_heads.append(jnp.einsum("bqk,bkd->bqd", p, v_h,
                                    preferred_element_type=jnp.float32))          # (B, L, dH)

    # context_layer.transpose(1,2).view(..., all_head_size) == concat over head dim
    ctx = jnp.concatenate(ctx_heads, axis=-1)               # (B, L, H)

    # output dense (no bias) + dropout (identity) + residual LayerNorm(s)
    h_out = jnp.einsum("ble,bef->blf", ctx, wo_ref[...],
                       preferred_element_type=jnp.float32)  # (B, L, H)
    h1 = _layer_norm(h_out + x, ln1_w_ref[...], ln1_b_ref[...])
    if not FIX_ATTENTION_RESIDUAL:
        # second residual + LayerNorm (config default path)
        h1 = _layer_norm(h1 + x, ln2_w_ref[...], ln2_b_ref[...])

    out_ref[...] = h1.astype(out_ref.dtype)


def ribonanzanet_attention(hidden_states, params):
    B, L, H = hidden_states.shape
    assert H == HIDDEN and H % NUM_HEADS == 0

    # Fuse Q|K|V weights (H, 3H) and broadcast the (already pre-transposed,
    # in-features x out-features) weights over batch so every in-kernel matmul
    # is a batched dot_general with matching batch dims.
    wqkv = jnp.concatenate([params["wq"], params["wk"], params["wv"]], axis=1)  # (H, 3H)
    wqkv_b = jnp.broadcast_to(wqkv[None], (B, H, 3 * H))
    wo_b = jnp.broadcast_to(params["wo"][None], (B, H, H))
    ln = lambda p: p.reshape(1, 1, H)

    flops = (2 * B * L * H * 3 * H                          # fused QKV projection
             + 2 * 2 * B * NUM_HEADS * L * L * D_HEAD       # scores + context matmuls
             + 2 * B * L * H * H                            # output projection
             + 16 * B * L * H)                              # softmax / LN elementwise (rough)
    transcendentals = B * NUM_HEADS * L * L + B * NUM_HEADS * L + 2 * B * L
    bytes_accessed = 4 * (2 * B * L * H + B * H * 3 * H + B * H * H + 4 * H)

    vmem_spec = pl.BlockSpec(memory_space=pltpu.MemorySpace.VMEM)

    return pl.pallas_call(
        attention_kernel,
        out_shape=jax.ShapeDtypeStruct((B, L, H), hidden_states.dtype),
        in_specs=[vmem_spec] * 7,
        out_specs=vmem_spec,
        cost_estimate=pl.CostEstimate(flops=flops,
                                      transcendentals=transcendentals,
                                      bytes_accessed=bytes_accessed),
    )(hidden_states, wqkv_b, wo_b,
      ln(params["ln1_w"]), ln(params["ln1_b"]),
      ln(params["ln2_w"]), ln(params["ln2_b"]))


def reference_jax(hidden_states, params):
    """Pure-JAX reference matching the PyTorch forward (eval mode)."""
    B, L, H = hidden_states.shape
    x = hidden_states
    q = x @ params["wq"]
    k = x @ params["wk"]
    v = x @ params["wv"]

    def split_heads(t):
        return t.reshape(B, L, NUM_HEADS, D_HEAD).transpose(0, 2, 1, 3)

    qh, kh, vh = split_heads(q), split_heads(k), split_heads(v)
    scores = jnp.einsum("bhqd,bhkd->bhqk", qh, kh) / math.sqrt(D_HEAD)
    probs = jax.nn.softmax(scores, axis=-1)
    ctx = jnp.einsum("bhqk,bhkd->bhqd", probs, vh)
    ctx = ctx.transpose(0, 2, 1, 3).reshape(B, L, H)

    h_out = ctx @ params["wo"]

    def ln(y, w, b):
        mu = jnp.mean(y, axis=-1, keepdims=True)
        var = jnp.mean((y - mu) ** 2, axis=-1, keepdims=True)
        return (y - mu) / jnp.sqrt(var + LN_EPS) * w + b

    h1 = ln(h_out + x, params["ln1_w"], params["ln1_b"])
    if not FIX_ATTENTION_RESIDUAL:
        h1 = ln(h1 + x, params["ln2_w"], params["ln2_b"])
    return h1


def make_params(key):
    ks = jax.random.split(key, 8)
    scale = 1.0 / math.sqrt(HIDDEN)
    return {
        "wq": jax.random.normal(ks[0], (HIDDEN, HIDDEN), jnp.float32) * scale,
        "wk": jax.random.normal(ks[1], (HIDDEN, HIDDEN), jnp.float32) * scale,
        "wv": jax.random.normal(ks[2], (HIDDEN, HIDDEN), jnp.float32) * scale,
        "wo": jax.random.normal(ks[3], (HIDDEN, HIDDEN), jnp.float32) * scale,
        "ln1_w": 1.0 + 0.1 * jax.random.normal(ks[4], (HIDDEN,), jnp.float32),
        "ln1_b": 0.1 * jax.random.normal(ks[5], (HIDDEN,), jnp.float32),
        "ln2_w": 1.0 + 0.1 * jax.random.normal(ks[6], (HIDDEN,), jnp.float32),
        "ln2_b": 0.1 * jax.random.normal(ks[7], (HIDDEN,), jnp.float32),
    }


if __name__ == "__main__":
    key = jax.random.PRNGKey(0)
    k_x, k_p = jax.random.split(key)
    hidden_states = jax.random.normal(k_x, (BATCH, SEQ_LEN, HIDDEN), jnp.float32)
    params = make_params(k_p)

    out = jax.block_until_ready(ribonanzanet_attention(hidden_states, params))
    ref = reference_jax(hidden_states, params)

    assert out.shape == (BATCH, SEQ_LEN, HIDDEN)
    # tolerance loosened slightly (2e-3) to accommodate the approximate (EUP)
    # reciprocal used for the softmax denominator
    max_diff = float(jnp.max(jnp.abs(out - ref)))
    assert jnp.allclose(out, ref, rtol=2e-3, atol=2e-3), (
        f"mismatch vs JAX reference, max abs diff = {max_diff}")

    print("KERNEL_OK")
</pallas_src>

<mosaic_0001>
module attributes {stable_mosaic.version = 11 : i64} {
  func.func @attention_kernel(%arg0: memref<2x8x32xf32, #tpu.memory_space<vmem>>, %arg1: memref<2x32x96xf32, #tpu.memory_space<vmem>>, %arg2: memref<2x32x32xf32, #tpu.memory_space<vmem>>, %arg3: memref<1x1x32xf32, #tpu.memory_space<vmem>>, %arg4: memref<1x1x32xf32, #tpu.memory_space<vmem>>, %arg5: memref<1x1x32xf32, #tpu.memory_space<vmem>>, %arg6: memref<1x1x32xf32, #tpu.memory_space<vmem>>, %arg7: memref<2x8x32xf32, #tpu.memory_space<vmem>>) attributes {dimension_semantics = [], scalar_prefetch = 0 : i64, scratch_operands = 0 : i64, tpu.core_type = #tpu.core_type<tc>} {
    %c0 = arith.constant 0 : index
    %c0_0 = arith.constant 0 : index
    %c0_1 = arith.constant 0 : index
    %0 = vector.load %arg0[%c0, %c0_0, %c0_1] : memref<2x8x32xf32, #tpu.memory_space<vmem>>, vector<2x8x32xf32>
    %c0_2 = arith.constant 0 : index
    %c0_3 = arith.constant 0 : index
    %c0_4 = arith.constant 0 : index
    %1 = vector.load %arg1[%c0_2, %c0_3, %c0_4] : memref<2x32x96xf32, #tpu.memory_space<vmem>>, vector<2x32x96xf32>
    "tpu.trace_start"() <{level = 10 : i32, message = "ble,bef->blf"}> : () -> ()
    %cst = arith.constant dense<0.000000e+00> : vector<2x8x96xf32>
    %2 = tpu.matmul %0, %1, %cst {dimension_numbers = #tpu.dot_dimension_numbers<[2], [1], [1], [2], [0, 0, 0, 1, 1, 2], [0], [0]>} : vector<2x8x32xf32>, vector<2x32x96xf32>, vector<2x8x96xf32> -> vector<2x8x96xf32>
    "tpu.trace_stop"() : () -> ()
    %3 = vector.extract_strided_slice %2 {offsets = [0, 0, 0], sizes = [2, 8, 8], strides = [1, 1, 1]} : vector<2x8x96xf32> to vector<2x8x8xf32>
    %4 = vector.extract_strided_slice %2 {offsets = [0, 0, 32], sizes = [2, 8, 8], strides = [1, 1, 1]} : vector<2x8x96xf32> to vector<2x8x8xf32>
    %5 = vector.extract_strided_slice %2 {offsets = [0, 0, 64], sizes = [2, 8, 8], strides = [1, 1, 1]} : vector<2x8x96xf32> to vector<2x8x8xf32>
    "tpu.trace_start"() <{level = 10 : i32, message = "bqd,bkd->bqk"}> : () -> ()
    %cst_5 = arith.constant dense<0.000000e+00> : vector<2x8x8xf32>
    %6 = tpu.matmul %3, %4, %cst_5 {dimension_numbers = #tpu.dot_dimension_numbers<[2], [2], [1], [1], [0, 0, 0, 1, 1, 1], [0], [0]>} : vector<2x8x8xf32>, vector<2x8x8xf32>, vector<2x8x8xf32> -> vector<2x8x8xf32>
    "tpu.trace_stop"() : () -> ()
    %cst_6 = arith.constant 0.353553385 : f32
    %7 = vector.broadcast %cst_6 : f32 to vector<2x8x8xf32>
    %8 = arith.mulf %6, %7 : vector<2x8x8xf32>
    %cst_7 = arith.constant dense<0xFF800000> : vector<2x8xf32>
    %9 = vector.multi_reduction <maximumf>, %8, %cst_7 [2] : vector<2x8x8xf32> to vector<2x8xf32>
    %10 = vector.shape_cast %9 : vector<2x8xf32> to vector<2x8x1xf32>
    %11 = vector.broadcast %10 : vector<2x8x1xf32> to vector<2x8x8xf32>
    %12 = arith.subf %8, %11 : vector<2x8x8xf32>
    %13 = math.exp %12 : vector<2x8x8xf32>
    %cst_8 = arith.constant dense<0.000000e+00> : vector<2x8xf32>
    %14 = vector.multi_reduction <add>, %13, %cst_8 [2] : vector<2x8x8xf32> to vector<2x8xf32>
    %15 = vector.shape_cast %14 : vector<2x8xf32> to vector<2x8x1xf32>
    %16 = tpu.reciprocal %15 {approx = true} : vector<2x8x1xf32> -> vector<2x8x1xf32>
    %17 = vector.broadcast %16 : vector<2x8x1xf32> to vector<2x8x8xf32>
    %18 = arith.mulf %13, %17 : vector<2x8x8xf32>
    "tpu.trace_start"() <{level = 10 : i32, message = "bqk,bkd->bqd"}> : () -> ()
    %cst_9 = arith.constant dense<0.000000e+00> : vector<2x8x8xf32>
    %19 = tpu.matmul %18, %5, %cst_9 {dimension_numbers = #tpu.dot_dimension_numbers<[2], [1], [1], [2], [0, 0, 0, 1, 1, 2], [0], [0]>} : vector<2x8x8xf32>, vector<2x8x8xf32>, vector<2x8x8xf32> -> vector<2x8x8xf32>
    "tpu.trace_stop"() : () -> ()
    %20 = vector.extract_strided_slice %2 {offsets = [0, 0, 8], sizes = [2, 8, 8], strides = [1, 1, 1]} : vector<2x8x96xf32> to vector<2x8x8xf32>
    %21 = vector.extract_strided_slice %2 {offsets = [0, 0, 40], sizes = [2, 8, 8], strides = [1, 1, 1]} : vector<2x8x96xf32> to vector<2x8x8xf32>
    %22 = vector.extract_strided_slice %2 {offsets = [0, 0, 72], sizes = [2, 8, 8], strides = [1, 1, 1]} : vector<2x8x96xf32> to vector<2x8x8xf32>
    "tpu.trace_start"() <{level = 10 : i32, message = "bqd,bkd->bqk"}> : () -> ()
    %cst_10 = arith.constant dense<0.000000e+00> : vector<2x8x8xf32>
    %23 = tpu.matmul %20, %21, %cst_10 {dimension_numbers = #tpu.dot_dimension_numbers<[2], [2], [1], [1], [0, 0, 0, 1, 1, 1], [0], [0]>} : vector<2x8x8xf32>, vector<2x8x8xf32>, vector<2x8x8xf32> -> vector<2x8x8xf32>
    "tpu.trace_stop"() : () -> ()
    %cst_11 = arith.constant 0.353553385 : f32
    %24 = vector.broadcast %cst_11 : f32 to vector<2x8x8xf32>
    %25 = arith.mulf %23, %24 : vector<2x8x8xf32>
    %cst_12 = arith.constant dense<0xFF800000> : vector<2x8xf32>
    %26 = vector.multi_reduction <maximumf>, %25, %cst_12 [2] : vector<2x8x8xf32> to vector<2x8xf32>
    %27 = vector.shape_cast %26 : vector<2x8xf32> to vector<2x8x1xf32>
    %28 = vector.broadcast %27 : vector<2x8x1xf32> to vector<2x8x8xf32>
    %29 = arith.subf %25, %28 : vector<2x8x8xf32>
    %30 = math.exp %29 : vector<2x8x8xf32>
    %cst_13 = arith.constant dense<0.000000e+00> : vector<2x8xf32>
    %31 = vector.multi_reduction <add>, %30, %cst_13 [2] : vector<2x8x8xf32> to vector<2x8xf32>
    %32 = vector.shape_cast %31 : vector<2x8xf32> to vector<2x8x1xf32>
    %33 = tpu.reciprocal %32 {approx = true} : vector<2x8x1xf32> -> vector<2x8x1xf32>
    %34 = vector.broadcast %33 : vector<2x8x1xf32> to vector<2x8x8xf32>
    %35 = arith.mulf %30, %34 : vector<2x8x8xf32>
    "tpu.trace_start"() <{level = 10 : i32, message = "bqk,bkd->bqd"}> : () -> ()
    %cst_14 = arith.constant dense<0.000000e+00> : vector<2x8x8xf32>
    %36 = tpu.matmul %35, %22, %cst_14 {dimension_numbers = #tpu.dot_dimension_numbers<[2], [1], [1], [2], [0, 0, 0, 1, 1, 2], [0], [0]>} : vector<2x8x8xf32>, vector<2x8x8xf32>, vector<2x8x8xf32> -> vector<2x8x8xf32>
    "tpu.trace_stop"() : () -> ()
    %37 = vector.extract_strided_slice %2 {offsets = [0, 0, 16], sizes = [2, 8, 8], strides = [1, 1, 1]} : vector<2x8x96xf32> to vector<2x8x8xf32>
    %38 = vector.extract_strided_slice %2 {offsets = [0, 0, 48], sizes = [2, 8, 8], strides = [1, 1, 1]} : vector<2x8x96xf32> to vector<2x8x8xf32>
    %39 = vector.extract_strided_slice %2 {offsets = [0, 0, 80], sizes = [2, 8, 8], strides = [1, 1, 1]} : vector<2x8x96xf32> to vector<2x8x8xf32>
    "tpu.trace_start"() <{level = 10 : i32, message = "bqd,bkd->bqk"}> : () -> ()
    %cst_15 = arith.constant dense<0.000000e+00> : vector<2x8x8xf32>
    %40 = tpu.matmul %37, %38, %cst_15 {dimension_numbers = #tpu.dot_dimension_numbers<[2], [2], [1], [1], [0, 0, 0, 1, 1, 1], [0], [0]>} : vector<2x8x8xf32>, vector<2x8x8xf32>, vector<2x8x8xf32> -> vector<2x8x8xf32>
    "tpu.trace_stop"() : () -> ()
    %cst_16 = arith.constant 0.353553385 : f32
    %41 = vector.broadcast %cst_16 : f32 to vector<2x8x8xf32>
    %42 = arith.mulf %40, %41 : vector<2x8x8xf32>
    %cst_17 = arith.constant dense<0xFF800000> : vector<2x8xf32>
    %43 = vector.multi_reduction <maximumf>, %42, %cst_17 [2] : vector<2x8x8xf32> to vector<2x8xf32>
    %44 = vector.shape_cast %43 : vector<2x8xf32> to vector<2x8x1xf32>
    %45 = vector.broadcast %44 : vector<2x8x1xf32> to vector<2x8x8xf32>
    %46 = arith.subf %42, %45 : vector<2x8x8xf32>
    %47 = math.exp %46 : vector<2x8x8xf32>
    %cst_18 = arith.constant dense<0.000000e+00> : vector<2x8xf32>
    %48 = vector.multi_reduction <add>, %47, %cst_18 [2] : vector<2x8x8xf32> to vector<2x8xf32>
    %49 = vector.shape_cast %48 : vector<2x8xf32> to vector<2x8x1xf32>
    %50 = tpu.reciprocal %49 {approx = true} : vector<2x8x1xf32> -> vector<2x8x1xf32>
    %51 = vector.broadcast %50 : vector<2x8x1xf32> to vector<2x8x8xf32>
    %52 = arith.mulf %47, %51 : vector<2x8x8xf32>
    "tpu.trace_start"() <{level = 10 : i32, message = "bqk,bkd->bqd"}> : () -> ()
    %cst_19 = arith.constant dense<0.000000e+00> : vector<2x8x8xf32>
    %53 = tpu.matmul %52, %39, %cst_19 {dimension_numbers = #tpu.dot_dimension_numbers<[2], [1], [1], [2], [0, 0, 0, 1, 1, 2], [0], [0]>} : vector<2x8x8xf32>, vector<2x8x8xf32>, vector<2x8x8xf32> -> vector<2x8x8xf32>
    "tpu.trace_stop"() : () -> ()
    %54 = vector.extract_strided_slice %2 {offsets = [0, 0, 24], sizes = [2, 8, 8], strides = [1, 1, 1]} : vector<2x8x96xf32> to vector<2x8x8xf32>
    %55 = vector.extract_strided_slice %2 {offsets = [0, 0, 56], sizes = [2, 8, 8], strides = [1, 1, 1]} : vector<2x8x96xf32> to vector<2x8x8xf32>
    %56 = vector.extract_strided_slice %2 {offsets = [0, 0, 88], sizes = [2, 8, 8], strides = [1, 1, 1]} : vector<2x8x96xf32> to vector<2x8x8xf32>
    "tpu.trace_start"() <{level = 10 : i32, message = "bqd,bkd->bqk"}> : () -> ()
    %cst_20 = arith.constant dense<0.000000e+00> : vector<2x8x8xf32>
    %57 = tpu.matmul %54, %55, %cst_20 {dimension_numbers = #tpu.dot_dimension_numbers<[2], [2], [1], [1], [0, 0, 0, 1, 1, 1], [0], [0]>} : vector<2x8x8xf32>, vector<2x8x8xf32>, vector<2x8x8xf32> -> vector<2x8x8xf32>
    "tpu.trace_stop"() : () -> ()
    %cst_21 = arith.constant 0.353553385 : f32
    %58 = vector.broadcast %cst_21 : f32 to vector<2x8x8xf32>
    %59 = arith.mulf %57, %58 : vector<2x8x8xf32>
    %cst_22 = arith.constant dense<0xFF800000> : vector<2x8xf32>
    %60 = vector.multi_reduction <maximumf>, %59, %cst_22 [2] : vector<2x8x8xf32> to vector<2x8xf32>
    %61 = vector.shape_cast %60 : vector<2x8xf32> to vector<2x8x1xf32>
    %62 = vector.broadcast %61 : vector<2x8x1xf32> to vector<2x8x8xf32>
    %63 = arith.subf %59, %62 : vector<2x8x8xf32>
    %64 = math.exp %63 : vector<2x8x8xf32>
    %cst_23 = arith.constant dense<0.000000e+00> : vector<2x8xf32>
    %65 = vector.multi_reduction <add>, %64, %cst_23 [2] : vector<2x8x8xf32> to vector<2x8xf32>
    %66 = vector.shape_cast %65 : vector<2x8xf32> to vector<2x8x1xf32>
    %67 = tpu.reciprocal %66 {approx = true} : vector<2x8x1xf32> -> vector<2x8x1xf32>
    %68 = vector.broadcast %67 : vector<2x8x1xf32> to vector<2x8x8xf32>
    %69 = arith.mulf %64, %68 : vector<2x8x8xf32>
    "tpu.trace_start"() <{level = 10 : i32, message = "bqk,bkd->bqd"}> : () -> ()
    %cst_24 = arith.constant dense<0.000000e+00> : vector<2x8x8xf32>
    %70 = tpu.matmul %69, %56, %cst_24 {dimension_numbers = #tpu.dot_dimension_numbers<[2], [1], [1], [2], [0, 0, 0, 1, 1, 2], [0], [0]>} : vector<2x8x8xf32>, vector<2x8x8xf32>, vector<2x8x8xf32> -> vector<2x8x8xf32>
    "tpu.trace_stop"() : () -> ()
    %71 = tpu.concatenate %19, %36, %53, %70 in 2 : vector<2x8x8xf32>, vector<2x8x8xf32>, vector<2x8x8xf32>, vector<2x8x8xf32> -> vector<2x8x32xf32>
    %c0_25 = arith.constant 0 : index
    %c0_26 = arith.constant 0 : index
    %c0_27 = arith.constant 0 : index
    %72 = vector.load %arg2[%c0_25, %c0_26, %c0_27] : memref<2x32x32xf32, #tpu.memory_space<vmem>>, vector<2x32x32xf32>
    "tpu.trace_start"() <{level = 10 : i32, message = "ble,bef->blf"}> : () -> ()
    %cst_28 = arith.constant dense<0.000000e+00> : vector<2x8x32xf32>
    %73 = tpu.matmul %71, %72, %cst_28 {dimension_numbers = #tpu.dot_dimension_numbers<[2], [1], [1], [2], [0, 0, 0, 1, 1, 2], [0], [0]>} : vector<2x8x32xf32>, vector<2x32x32xf32>, vector<2x8x32xf32> -> vector<2x8x32xf32>
    "tpu.trace_stop"() : () -> ()
    %74 = arith.addf %73, %0 : vector<2x8x32xf32>
    %c0_29 = arith.constant 0 : index
    %c0_30 = arith.constant 0 : index
    %c0_31 = arith.constant 0 : index
    %75 = vector.load %arg3[%c0_29, %c0_30, %c0_31] : memref<1x1x32xf32, #tpu.memory_space<vmem>>, vector<1x1x32xf32>
    %c0_32 = arith.constant 0 : index
    %c0_33 = arith.constant 0 : index
    %c0_34 = arith.constant 0 : index
    %76 = vector.load %arg4[%c0_32, %c0_33, %c0_34] : memref<1x1x32xf32, #tpu.memory_space<vmem>>, vector<1x1x32xf32>
    %cst_35 = arith.constant dense<0.000000e+00> : vector<2x8xf32>
    %77 = vector.multi_reduction <add>, %74, %cst_35 [2] : vector<2x8x32xf32> to vector<2x8xf32>
    %78 = vector.shape_cast %77 : vector<2x8xf32> to vector<2x8x1xf32>
    %cst_36 = arith.constant 3.200000e+01 : f32
    %79 = vector.broadcast %cst_36 : f32 to vector<2x8x1xf32>
    %80 = arith.divf %78, %79 : vector<2x8x1xf32>
    %81 = vector.broadcast %80 : vector<2x8x1xf32> to vector<2x8x32xf32>
    %82 = arith.subf %74, %81 : vector<2x8x32xf32>
    %83 = arith.mulf %82, %82 : vector<2x8x32xf32>
    %cst_37 = arith.constant dense<0.000000e+00> : vector<2x8xf32>
    %84 = vector.multi_reduction <add>, %83, %cst_37 [2] : vector<2x8x32xf32> to vector<2x8xf32>
    %85 = vector.shape_cast %84 : vector<2x8xf32> to vector<2x8x1xf32>
    %cst_38 = arith.constant 3.200000e+01 : f32
    %86 = vector.broadcast %cst_38 : f32 to vector<2x8x1xf32>
    %87 = arith.divf %85, %86 : vector<2x8x1xf32>
    %88 = vector.broadcast %80 : vector<2x8x1xf32> to vector<2x8x32xf32>
    %89 = arith.subf %74, %88 : vector<2x8x32xf32>
    %cst_39 = arith.constant 9.99999996E-13 : f32
    %90 = vector.broadcast %cst_39 : f32 to vector<2x8x1xf32>
    %91 = arith.addf %87, %90 : vector<2x8x1xf32>
    %92 = math.rsqrt %91 : vector<2x8x1xf32>
    %93 = vector.broadcast %92 : vector<2x8x1xf32> to vector<2x8x32xf32>
    %94 = arith.mulf %89, %93 : vector<2x8x32xf32>
    %95 = vector.broadcast %75 : vector<1x1x32xf32> to vector<2x8x32xf32>
    %96 = arith.mulf %94, %95 : vector<2x8x32xf32>
    %97 = vector.broadcast %76 : vector<1x1x32xf32> to vector<2x8x32xf32>
    %98 = arith.addf %96, %97 : vector<2x8x32xf32>
    %99 = arith.addf %98, %0 : vector<2x8x32xf32>
    %c0_40 = arith.constant 0 : index
    %c0_41 = arith.constant 0 : index
    %c0_42 = arith.constant 0 : index
    %100 = vector.load %arg5[%c0_40, %c0_41, %c0_42] : memref<1x1x32xf32, #tpu.memory_space<vmem>>, vector<1x1x32xf32>
    %c0_43 = arith.constant 0 : index
    %c0_44 = arith.constant 0 : index
    %c0_45 = arith.constant 0 : index
    %101 = vector.load %arg6[%c0_43, %c0_44, %c0_45] : memref<1x1x32xf32, #tpu.memory_space<vmem>>, vector<1x1x32xf32>
    %cst_46 = arith.constant dense<0.000000e+00> : vector<2x8xf32>
    %102 = vector.multi_reduction <add>, %99, %cst_46 [2] : vector<2x8x32xf32> to vector<2x8xf32>
    %103 = vector.shape_cast %102 : vector<2x8xf32> to vector<2x8x1xf32>
    %cst_47 = arith.constant 3.200000e+01 : f32
    %104 = vector.broadcast %cst_47 : f32 to vector<2x8x1xf32>
    %105 = arith.divf %103, %104 : vector<2x8x1xf32>
    %106 = vector.broadcast %105 : vector<2x8x1xf32> to vector<2x8x32xf32>
    %107 = arith.subf %99, %106 : vector<2x8x32xf32>
    %108 = arith.mulf %107, %107 : vector<2x8x32xf32>
    %cst_48 = arith.constant dense<0.000000e+00> : vector<2x8xf32>
    %109 = vector.multi_reduction <add>, %108, %cst_48 [2] : vector<2x8x32xf32> to vector<2x8xf32>
    %110 = vector.shape_cast %109 : vector<2x8xf32> to vector<2x8x1xf32>
    %cst_49 = arith.constant 3.200000e+01 : f32
    %111 = vector.broadcast %cst_49 : f32 to vector<2x8x1xf32>
    %112 = arith.divf %110, %111 : vector<2x8x1xf32>
    %113 = vector.broadcast %105 : vector<2x8x1xf32> to vector<2x8x32xf32>
    %114 = arith.subf %99, %113 : vector<2x8x32xf32>
    %cst_50 = arith.constant 9.99999996E-13 : f32
    %115 = vector.broadcast %cst_50 : f32 to vector<2x8x1xf32>
    %116 = arith.addf %112, %115 : vector<2x8x1xf32>
    %117 = math.rsqrt %116 : vector<2x8x1xf32>
    %118 = vector.broadcast %117 : vector<2x8x1xf32> to vector<2x8x32xf32>
    %119 = arith.mulf %114, %118 : vector<2x8x32xf32>
    %120 = vector.broadcast %100 : vector<1x1x32xf32> to vector<2x8x32xf32>
    %121 = arith.mulf %119, %120 : vector<2x8x32xf32>
    %122 = vector.broadcast %101 : vector<1x1x32xf32> to vector<2x8x32xf32>
    %123 = arith.addf %121, %122 : vector<2x8x32xf32>
    %c0_51 = arith.constant 0 : index
    %c0_52 = arith.constant 0 : index
    %c0_53 = arith.constant 0 : index
    %124 = vector.load %arg7[%c0_51, %c0_52, %c0_53] : memref<2x8x32xf32, #tpu.memory_space<vmem>>, vector<2x8x32xf32>
    tpu.vector_store %arg7[%c0_51, %c0_52, %c0_53], %123 {strides = array<i32>} : memref<2x8x32xf32, #tpu.memory_space<vmem>>, vector<2x8x32xf32>,
    return
  }
}

</mosaic_0001>

<llo_original>
// kernel: tpu_custom_call.1
$region0: #{tpu_custom_call.1}
  #allocation0 [shape = 'u32[]', space=smem, size = 0x4, offset = 0x4, fixed_abs, tag = 'smem constant byte address 0x4 - core index']
  #allocation1 [shape = 'u32[144,128]{1,0:T(1,128)}', space=vmem, size = 0x12000, scoped, tag = 'internal scratch']
  %s0 = inlined_call_operand.hbm [shape: f32[2,8,32], index: 0, kind: input, shape index: {}]
  %s1 = inlined_call_operand.hbm [shape: f32[2,32,96], index: 1, kind: input, shape index: {}]
  %s2 = inlined_call_operand.hbm [shape: f32[2,32,32], index: 2, kind: input, shape index: {}]
  %s3 = inlined_call_operand.vmem [shape: f32[1,1,32], index: 3, kind: input, shape index: {}]
  %s4 = inlined_call_operand.vmem [shape: f32[1,1,32], index: 4, kind: input, shape index: {}]
  %s5 = inlined_call_operand.vmem [shape: f32[1,1,32], index: 5, kind: input, shape index: {}]
  %s6 = inlined_call_operand.vmem [shape: f32[1,1,32], index: 6, kind: input, shape index: {}]
  %s7 = inlined_call_operand.hbm [shape: f32[2,8,32], index: 7, kind: output, shape index: {}]
  %s8 = sld [smem:[#allocation0]]
  $region50: #{tpu_custom_call.1} parent=0
    _
  %s10 = ssub.s32 1, %s8
  %s11 = scalar_select 0, %s10, %s8
  $region1: #{tpu_custom_call.1} parent=0
    #allocation2 [shape = 'u8[8192]{0}', space=vmem, size = 0x2000, scoped, tag = 'input window, operand 0, single buffered']
    #allocation3 [shape = 's32[1]{0}', space=sflag, size = 0x4, scoped, tag = 'scoped memory for tpu_custom_call.1']
    #allocation4 [shape = 's32[1]{0}', space=sflag, size = 0x4, scoped, tag = 'scoped memory for tpu_custom_call.1']
    #allocation5 [shape = 'u8[32768]{0}', space=vmem, size = 0x8000, scoped, tag = 'input window, operand 1, single buffered']
    #allocation6 [shape = 's32[1]{0}', space=sflag, size = 0x4, scoped, tag = 'scoped memory for tpu_custom_call.1']
    #allocation7 [shape = 'u8[32768]{0}', space=vmem, size = 0x8000, scoped, tag = 'input window, operand 2, single buffered']
    #allocation8 [shape = 'u8[8192]{0}', space=vmem, size = 0x2000, scoped, tag = 'output window, operand 0, single buffered']
    %12 = vsyncpa [#allocation3], 0
    %13 = vsyncpa [#allocation6], 0
    %14 = vsyncpa [#allocation4], 0
    // Predicated region
    $region2: #{tpu_custom_call.1} parent=1 // pred_check
      _
    $region3: #{tpu_custom_call.1} parent=1 // pred_check_branch
      %16 = sbr.rel (0) target = $region5
    $region4: #{tpu_custom_call.1} parent=1 // pred_region
      %s18 = ssub.s32 256, 256
      %19 = vsyncadd [#allocation3], %s18
      %s20 = sshll.u32 [#allocation2], 4
      %s21 = int_to_ptr.vmem [resolvable:$true] %s20
      %26 = dma.hbm_to_vmem [thread:$0]  %s0, 256, %s21, [#allocation3], 128, 128, 8
    $region5: #{tpu_custom_call.1} parent=1 // pred_fallthru
      _
    // Predicated region
    $region6: #{tpu_custom_call.1} parent=1 // pred_check
      _
    $region7: #{tpu_custom_call.1} parent=1 // pred_check_branch
      %28 = sbr.rel (0) target = $region9
    $region8: #{tpu_custom_call.1} parent=1 // pred_region
      %s30 = ssub.s32 1024, 1024
      %31 = vsyncadd [#allocation6], %s30
      %s32 = sshll.u32 [#allocation5], 4
      %s33 = int_to_ptr.vmem [resolvable:$true] %s32
      %38 = dma.hbm_to_vmem [thread:$0]  %s1, 1024, %s33, [#allocation6], 128, 128, 8
    $region9: #{tpu_custom_call.1} parent=1 // pred_fallthru
      _
    // Predicated region
    $region10: #{tpu_custom_call.1} parent=1 // pred_check
      _
    $region11: #{tpu_custom_call.1} parent=1 // pred_check_branch
      %40 = sbr.rel (0) target = $region13
    $region12: #{tpu_custom_call.1} parent=1 // pred_region
      %s42 = ssub.s32 1024, 1024
      %43 = vsyncadd [#allocation6], %s42
      %s44 = sshll.u32 [#allocation7], 4
      %s45 = int_to_ptr.vmem [resolvable:$true] %s44
      %50 = dma.hbm_to_vmem [thread:$0]  %s2, 1024, %s45, [#allocation6], 128, 128, 8
    $region13: #{tpu_custom_call.1} parent=1 // pred_fallthru
      _
    // Predicated region
    $region14: #{tpu_custom_call.1} parent=1 // pred_check
      _
    $region15: #{tpu_custom_call.1} parent=1 // pred_check_branch
      %52 = sbr.rel (0) target = $region17
    $region16: #{tpu_custom_call.1} parent=1 // pred_region
      _
    $region17: #{tpu_custom_call.1} parent=1 // pred_fallthru
      _
    // Predicated region
    $region18: #{tpu_custom_call.1} parent=1 // pred_check
      _
    $region19: #{tpu_custom_call.1} parent=1 // pred_check_branch
      %54 = sbr.rel (0) target = $region21
    $region20: #{tpu_custom_call.1} parent=1 // pred_region
      _
    $region21: #{tpu_custom_call.1} parent=1 // pred_fallthru
      _
    // Predicated region
    $region22: #{tpu_custom_call.1} parent=1 // pred_check
      _
    $region23: #{tpu_custom_call.1} parent=1 // pred_check_branch
      %56 = sbr.rel (0) target = $region25
    $region24: #{tpu_custom_call.1} parent=1 // pred_region
      _
    $region25: #{tpu_custom_call.1} parent=1 // pred_fallthru
      _
    // Predicated region
    $region26: #{tpu_custom_call.1} parent=1 // pred_check
      _
    $region27: #{tpu_custom_call.1} parent=1 // pred_check_branch
      %58 = sbr.rel (0) target = $region29
    $region28: #{tpu_custom_call.1} parent=1 // pred_region
      _
    $region29: #{tpu_custom_call.1} parent=1 // pred_fallthru
      _
    // Predicated region
    $region30: #{tpu_custom_call.1} parent=1 // pred_check
      _
    $region31: #{tpu_custom_call.1} parent=1 // pred_check_branch
      %60 = sbr.rel (0) target = $region33
    $region32: #{tpu_custom_call.1} parent=1 // pred_region
      %61 = dma.done [#allocation3], 256
    $region33: #{tpu_custom_call.1} parent=1 // pred_fallthru
      _
    // Predicated region
    $region34: #{tpu_custom_call.1} parent=1 // pred_check
      _
    $region35: #{tpu_custom_call.1} parent=1 // pred_check_branch
      %63 = sbr.rel (0) target = $region37
    $region36: #{tpu_custom_call.1} parent=1 // pred_region
      %64 = dma.done [#allocation6], 1024
    $region37: #{tpu_custom_call.1} parent=1 // pred_fallthru
      _
    // Predicated region
    $region38: #{tpu_custom_call.1} parent=1 // pred_check
      _
    $region39: #{tpu_custom_call.1} parent=1 // pred_check_branch
      %66 = sbr.rel (0) target = $region41
    $region40: #{tpu_custom_call.1} parent=1 // pred_region
      %67 = dma.done [#allocation6], 1024
    $region41: #{tpu_custom_call.1} parent=1 // pred_fallthru
      _
    %v68 = vld [vmem:[#allocation2] sm:$0xff]
    %v69 = vld [vmem:[#allocation2 + $0x8] sm:$0xff]
    %v70 = vld [vmem:[#allocation5] sm:$0xff]
    %v71 = vld [vmem:[#allocation5 + $0x8] sm:$0xff]
    %v72 = vld [vmem:[#allocation5 + $0x10] sm:$0xff]
    %v73 = vld [vmem:[#allocation5 + $0x18] sm:$0xff]
    %v74 = vld [vmem:[#allocation5 + $0x20] sm:$0xff]
    %v75 = vld [vmem:[#allocation5 + $0x28] sm:$0xff]
    %v76 = vld [vmem:[#allocation5 + $0x30] sm:$0xff]
    %v77 = vld [vmem:[#allocation5 + $0x38] sm:$0xff]
    %vm78 = vcmask 261120
    %v80 = vsel %vm78, %v68, 0
    %82 = vmatprep.subr.mxu0 0.0
    %83 = vmatpush1.msra.mxu0 0.0
    %84 = vmatprep.subr.mxu0 0.0
    %85 = vmatpush1.msra.mxu0 0.0
    %86 = vmatprep.subr.mxu0 0.0
    %87 = vmatpush1.msra.mxu0 0.0
    %88 = vmatprep.subr.mxu0 0.0
    %89 = vmatpush1.msra.mxu0 0.0
    %90 = vmatprep.subr.mxu0 0.0
    %91 = vmatpush1.msra.mxu0 0.0
    %92 = vmatprep.subr.mxu0 0.0
    %93 = vmatpush1.msra.mxu0 0.0
    %94 = vmatprep.subr.mxu0 0.0
    %95 = vmatpush1.msra.mxu0 0.0
    %96 = vmatprep.subr.mxu0 0.0
    %97 = vmatpush1.msra.mxu0 0.0
    %98 = vmatprep.subr.mxu0 0.0
    %99 = vmatpush1.msra.mxu0 0.0
    %100 = vmatprep.subr.mxu0 0.0
    %101 = vmatpush1.msra.mxu0 0.0
    %102 = vmatprep.subr.mxu0 0.0
    %103 = vmatpush1.msra.mxu0 0.0
    %104 = vmatprep.subr.mxu0 0.0
    %105 = vmatpush1.msra.mxu0 0.0
    %106 = vmatprep.subr.mxu0 0.0
    %107 = vmatpush1.msra.mxu0 %v73
    %108 = vmatprep.subr.mxu0 0.0
    %109 = vmatpush1.msra.mxu0 %v72
    %110 = vmatprep.subr.mxu0 0.0
    %111 = vmatpush1.msra.mxu0 %v71
    %112 = vmatprep.subr.mxu0 0.0
    %113 = vmatpush1.msra.mxu0 %v70
    %114 = vmatprep.subr.mxu0 0.0
    %115 = vmatpush2.msra.mxu0 0.0
    %116 = vmatprep.subr.mxu0 0.0
    %117 = vmatpush2.msra.mxu0 0.0
    %118 = vmatprep.subr.mxu0 0.0
    %119 = vmatpush2.msra.mxu0 0.0
    %120 = vmatprep.subr.mxu0 0.0
    %121 = vmatpush2.msra.mxu0 0.0
    %122 = vmatprep.subr.mxu0 0.0
    %123 = vmatpush2.msra.mxu0 0.0
    %124 = vmatprep.subr.mxu0 0.0
    %125 = vmatpush2.msra.mxu0 0.0
    %126 = vmatprep.subr.mxu0 0.0
    %127 = vmatpush2.msra.mxu0 0.0
    %128 = vmatprep.subr.mxu0 0.0
    %129 = vmatpush2.msra.mxu0 0.0
    %130 = vmatprep.subr.mxu0 0.0
    %131 = vmatpush2.msra.mxu0 0.0
    %132 = vmatprep.subr.mxu0 0.0
    %133 = vmatpush2.msra.mxu0 0.0
    %134 = vmatprep.subr.mxu0 0.0
    %135 = vmatpush2.msra.mxu0 0.0
    %136 = vmatprep.subr.mxu0 0.0
    %137 = vmatpush2.msra.mxu0 0.0
    %138 = vmatprep.subr.mxu0 0.0
    %139 = vmatpush2.msra.mxu0 0.0
    %140 = vmatprep.subr.mxu0 0.0
    %141 = vmatpush2.msra.mxu0 0.0
    %142 = vmatprep.subr.mxu0 0.0
    %143 = vmatpush2.msra.mxu0 0.0
    %144 = vmatprep.subr.mxu0 0.0
    %145 = vmatpush2.msra.mxu0 0.0
    %146 = vmatprep.mubr.f32.mxu0 0.0
    %147 = vmatmul.mubr.f32.gmra.mxu0 %v80
    %v148 = vpop.f32.mrf.mxu0
    %v149 = vadd.f32 0.0, %v148
    %v150 = vpop.f32.mrf.mxu0
    %151 = vdwg.mxu0
    %v153 = vsel %vm78, %v69, 0
    %155 = vmatprep.subr.mxu0 0.0
    %156 = vmatpush1.msra.mxu0 0.0
    %157 = vmatprep.subr.mxu0 0.0
    %158 = vmatpush1.msra.mxu0 0.0
    %159 = vmatprep.subr.mxu0 0.0
    %160 = vmatpush1.msra.mxu0 0.0
    %161 = vmatprep.subr.mxu0 0.0
    %162 = vmatpush1.msra.mxu0 0.0
    %163 = vmatprep.subr.mxu0 0.0
    %164 = vmatpush1.msra.mxu0 0.0
    %165 = vmatprep.subr.mxu0 0.0
    %166 = vmatpush1.msra.mxu0 0.0
    %167 = vmatprep.subr.mxu0 0.0
    %168 = vmatpush1.msra.mxu0 0.0
    %169 = vmatprep.subr.mxu0 0.0
    %170 = vmatpush1.msra.mxu0 0.0
    %171 = vmatprep.subr.mxu0 0.0
    %172 = vmatpush1.msra.mxu0 0.0
    %173 = vmatprep.subr.mxu0 0.0
    %174 = vmatpush1.msra.mxu0 0.0
    %175 = vmatprep.subr.mxu0 0.0
    %176 = vmatpush1.msra.mxu0 0.0
    %177 = vmatprep.subr.mxu0 0.0
    %178 = vmatpush1.msra.mxu0 0.0
    %179 = vmatprep.subr.mxu0 0.0
    %180 = vmatpush1.msra.mxu0 %v77
    %181 = vmatprep.subr.mxu0 0.0
    %182 = vmatpush1.msra.mxu0 %v76
    %183 = vmatprep.subr.mxu0 0.0
    %184 = vmatpush1.msra.mxu0 %v75
    %185 = vmatprep.subr.mxu0 0.0
    %186 = vmatpush1.msra.mxu0 %v74
    %187 = vmatprep.subr.mxu0 0.0
    %188 = vmatpush2.msra.mxu0 0.0
    %189 = vmatprep.subr.mxu0 0.0
    %190 = vmatpush2.msra.mxu0 0.0
    %191 = vmatprep.subr.mxu0 0.0
    %192 = vmatpush2.msra.mxu0 0.0
    %193 = vmatprep.subr.mxu0 0.0
    %194 = vmatpush2.msra.mxu0 0.0
    %195 = vmatprep.subr.mxu0 0.0
    %196 = vmatpush2.msra.mxu0 0.0
    %197 = vmatprep.subr.mxu0 0.0
    %198 = vmatpush2.msra.mxu0 0.0
    %199 = vmatprep.subr.mxu0 0.0
    %200 = vmatpush2.msra.mxu0 0.0
    %201 = vmatprep.subr.mxu0 0.0
    %202 = vmatpush2.msra.mxu0 0.0
    %203 = vmatprep.subr.mxu0 0.0
    %204 = vmatpush2.msra.mxu0 0.0
    %205 = vmatprep.subr.mxu0 0.0
    %206 = vmatpush2.msra.mxu0 0.0
    %207 = vmatprep.subr.mxu0 0.0
    %208 = vmatpush2.msra.mxu0 0.0
    %209 = vmatprep.subr.mxu0 0.0
    %210 = vmatpush2.msra.mxu0 0.0
    %211 = vmatprep.subr.mxu0 0.0
    %212 = vmatpush2.msra.mxu0 0.0
    %213 = vmatprep.subr.mxu0 0.0
    %214 = vmatpush2.msra.mxu0 0.0
    %215 = vmatprep.subr.mxu0 0.0
    %216 = vmatpush2.msra.mxu0 0.0
    %217 = vmatprep.subr.mxu0 0.0
    %218 = vmatpush2.msra.mxu0 0.0
    %219 = vmatprep.mubr.f32.mxu0 0.0
    %220 = vmatmul.mubr.f32.gmra.mxu0 %v153
    %v221 = vpop.f32.mrf.mxu0
    %v222 = vadd.f32 0.0, %v221
    %v223 = vpop.f32.mrf.mxu0
    %224 = vdwg.mxu0
    %226 = vrot.lane.b32.xlu0 %v149, 96
    %v227 = vpop.permute.xlu0 %226
    %vm228 = vcmask 64512
    %v229 = vsel %vm228, %v149, 0
    %v231 = vsel %vm228, %v227, 0
    %233 = vmatprep.subr.mxu0 0.0
    %234 = vmatpush1.xpose.msra.mxu0 0.0
    %235 = vmatprep.subr.mxu0 0.0
    %236 = vmatpush1.xpose.msra.mxu0 0.0
    %237 = vmatprep.subr.mxu0 0.0
    %238 = vmatpush1.xpose.msra.mxu0 0.0
    %239 = vmatprep.subr.mxu0 0.0
    %240 = vmatpush1.xpose.msra.mxu0 0.0
    %241 = vmatprep.subr.mxu0 0.0
    %242 = vmatpush1.xpose.msra.mxu0 0.0
    %243 = vmatprep.subr.mxu0 0.0
    %244 = vmatpush1.xpose.msra.mxu0 0.0
    %245 = vmatprep.subr.mxu0 0.0
    %246 = vmatpush1.xpose.msra.mxu0 0.0
    %247 = vmatprep.subr.mxu0 0.0
    %248 = vmatpush1.xpose.msra.mxu0 0.0
    %249 = vmatprep.subr.mxu0 0.0
    %250 = vmatpush1.xpose.msra.mxu0 0.0
    %251 = vmatprep.subr.mxu0 0.0
    %252 = vmatpush1.xpose.msra.mxu0 0.0
    %253 = vmatprep.subr.mxu0 0.0
    %254 = vmatpush1.xpose.msra.mxu0 0.0
    %255 = vmatprep.subr.mxu0 0.0
    %256 = vmatpush1.xpose.msra.mxu0 0.0
    %257 = vmatprep.subr.mxu0 0.0
    %258 = vmatpush1.xpose.msra.mxu0 0.0
    %259 = vmatprep.subr.mxu0 0.0
    %260 = vmatpush1.xpose.msra.mxu0 0.0
    %261 = vmatprep.subr.mxu0 0.0
    %262 = vmatpush1.xpose.msra.mxu0 0.0
    %263 = vmatprep.subr.mxu0 0.0
    %264 = vmatpush1.xpose.msra.mxu0 %v231
    %265 = vmatprep.subr.mxu0 0.0
    %266 = vmatpush2.xpose.msra.mxu0 0.0
    %267 = vmatprep.subr.mxu0 0.0
    %268 = vmatpush2.xpose.msra.mxu0 0.0
    %269 = vmatprep.subr.mxu0 0.0
    %270 = vmatpush2.xpose.msra.mxu0 0.0
    %271 = vmatprep.subr.mxu0 0.0
    %272 = vmatpush2.xpose.msra.mxu0 0.0
    %273 = vmatprep.subr.mxu0 0.0
    %274 = vmatpush2.xpose.msra.mxu0 0.0
    %275 = vmatprep.subr.mxu0 0.0
    %276 = vmatpush2.xpose.msra.mxu0 0.0
    %277 = vmatprep.subr.mxu0 0.0
    %278 = vmatpush2.xpose.msra.mxu0 0.0
    %279 = vmatprep.subr.mxu0 0.0
    %280 = vmatpush2.xpose.msra.mxu0 0.0
    %281 = vmatprep.subr.mxu0 0.0
    %282 = vmatpush2.xpose.msra.mxu0 0.0
    %283 = vmatprep.subr.mxu0 0.0
    %284 = vmatpush2.xpose.msra.mxu0 0.0
    %285 = vmatprep.subr.mxu0 0.0
    %286 = vmatpush2.xpose.msra.mxu0 0.0
    %287 = vmatprep.subr.mxu0 0.0
    %288 = vmatpush2.xpose.msra.mxu0 0.0
    %289 = vmatprep.subr.mxu0 0.0
    %290 = vmatpush2.xpose.msra.mxu0 0.0
    %291 = vmatprep.subr.mxu0 0.0
    %292 = vmatpush2.xpose.msra.mxu0 0.0
    %293 = vmatprep.subr.mxu0 0.0
    %294 = vmatpush2.xpose.msra.mxu0 0.0
    %295 = vmatprep.subr.mxu0 0.0
    %296 = vmatpush2.xpose.msra.mxu0 0.0
    %297 = vmatprep.mubr.f32.mxu0 0.0
    %298 = vmatmul.mubr.f32.gmra.mxu0 %v229
    %v299 = vpop.f32.mrf.mxu0
    %v300 = vadd.f32 0.0, %v299
    %v301 = vpop.f32.mrf.mxu0
    %302 = vdwg.mxu0
    %304 = vrot.lane.b32.xlu0 %v222, 96
    %v305 = vpop.permute.xlu0 %304
    %v306 = vsel %vm228, %v222, 0
    %v308 = vsel %vm228, %v305, 0
    %310 = vmatprep.subr.mxu0 0.0
    %311 = vmatpush1.xpose.msra.mxu0 0.0
    %312 = vmatprep.subr.mxu0 0.0
    %313 = vmatpush1.xpose.msra.mxu0 0.0
    %314 = vmatprep.subr.mxu0 0.0
    %315 = vmatpush1.xpose.msra.mxu0 0.0
    %316 = vmatprep.subr.mxu0 0.0
    %317 = vmatpush1.xpose.msra.mxu0 0.0
    %318 = vmatprep.subr.mxu0 0.0
    %319 = vmatpush1.xpose.msra.mxu0 0.0
    %320 = vmatprep.subr.mxu0 0.0
    %321 = vmatpush1.xpose.msra.mxu0 0.0
    %322 = vmatprep.subr.mxu0 0.0
    %323 = vmatpush1.xpose.msra.mxu0 0.0
    %324 = vmatprep.subr.mxu0 0.0
    %325 = vmatpush1.xpose.msra.mxu0 0.0
    %326 = vmatprep.subr.mxu0 0.0
    %327 = vmatpush1.xpose.msra.mxu0 0.0
    %328 = vmatprep.subr.mxu0 0.0
    %329 = vmatpush1.xpose.msra.mxu0 0.0
    %330 = vmatprep.subr.mxu0 0.0
    %331 = vmatpush1.xpose.msra.mxu0 0.0
    %332 = vmatprep.subr.mxu0 0.0
    %333 = vmatpush1.xpose.msra.mxu0 0.0
    %334 = vmatprep.subr.mxu0 0.0
    %335 = vmatpush1.xpose.msra.mxu0 0.0
    %336 = vmatprep.subr.mxu0 0.0
    %337 = vmatpush1.xpose.msra.mxu0 0.0
    %338 = vmatprep.subr.mxu0 0.0
    %339 = vmatpush1.xpose.msra.mxu0 0.0
    %340 = vmatprep.subr.mxu0 0.0
    %341 = vmatpush1.xpose.msra.mxu0 %v308
    %342 = vmatprep.subr.mxu0 0.0
    %343 = vmatpush2.xpose.msra.mxu0 0.0
    %344 = vmatprep.subr.mxu0 0.0
    %345 = vmatpush2.xpose.msra.mxu0 0.0
    %346 = vmatprep.subr.mxu0 0.0
    %347 = vmatpush2.xpose.msra.mxu0 0.0
    %348 = vmatprep.subr.mxu0 0.0
    %349 = vmatpush2.xpose.msra.mxu0 0.0
    %350 = vmatprep.subr.mxu0 0.0
    %351 = vmatpush2.xpose.msra.mxu0 0.0
    %352 = vmatprep.subr.mxu0 0.0
    %353 = vmatpush2.xpose.msra.mxu0 0.0
    %354 = vmatprep.subr.mxu0 0.0
    %355 = vmatpush2.xpose.msra.mxu0 0.0
    %356 = vmatprep.subr.mxu0 0.0
    %357 = vmatpush2.xpose.msra.mxu0 0.0
    %358 = vmatprep.subr.mxu0 0.0
    %359 = vmatpush2.xpose.msra.mxu0 0.0
    %360 = vmatprep.subr.mxu0 0.0
    %361 = vmatpush2.xpose.msra.mxu0 0.0
    %362 = vmatprep.subr.mxu0 0.0
    %363 = vmatpush2.xpose.msra.mxu0 0.0
    %364 = vmatprep.subr.mxu0 0.0
    %365 = vmatpush2.xpose.msra.mxu0 0.0
    %366 = vmatprep.subr.mxu0 0.0
    %367 = vmatpush2.xpose.msra.mxu0 0.0
    %368 = vmatprep.subr.mxu0 0.0
    %369 = vmatpush2.xpose.msra.mxu0 0.0
    %370 = vmatprep.subr.mxu0 0.0
    %371 = vmatpush2.xpose.msra.mxu0 0.0
    %372 = vmatprep.subr.mxu0 0.0
    %373 = vmatpush2.xpose.msra.mxu0 0.0
    %374 = vmatprep.mubr.f32.mxu0 0.0
    %375 = vmatmul.mubr.f32.gmra.mxu0 %v306
    %v376 = vpop.f32.mrf.mxu0
    %v377 = vadd.f32 0.0, %v376
    %v378 = vpop.f32.mrf.mxu0
    %379 = vdwg.mxu0
    %v380 = vmul.f32 %v300, 0.35355338
    %v381 = vmul.f32 %v377, 0.35355338
    %v382 = vsel %vm228, %v380, -inf
    %383 = vmax.xlane.f32.xlu0 %v382
    %v384 = vpop.xlane.xlu0 %383
    %v385 = vsel %vm228, %v381, -inf
    %386 = vmax.xlane.f32.xlu0 %v385
    %v387 = vpop.xlane.xlu0 %386
    %v388 = vsub.f32 %v380, %v384
    %v389 = vsub.f32 %v381, %v387
    %v390 = vmul.f32 %v388, 1.442695
    %v391 = vpow.pop %v390
    %v392 = vmul.f32 %v389, 1.442695
    %v393 = vpow.pop %v392
    %v394 = vsel %vm228, %v391, 0.0
    %395 = vadd.xlane.f32.xlu0 %v394
    %v396 = vpop.xlane.xlu0 %395
    %v397 = vsel %vm228, %v393, 0.0
    %398 = vadd.xlane.f32.xlu0 %v397
    %v399 = vpop.xlane.xlu0 %398
    %v400 = vrcp.pop %v396
    %v401 = vrcp.pop %v399
    %v402 = vmul.f32 %v391, %v400
    %v403 = vmul.f32 %v393, %v401
    %404 = vrot.lane.b32.xlu0 %v149, 64
    %v405 = vpop.permute.xlu0 %404
    %v408 = vsel %vm228, %v402, 0
    %410 = vmatprep.subr.mxu0 0.0
    %411 = vmatpush1.msra.mxu0 0.0
    %412 = vmatprep.subr.mxu0 0.0
    %413 = vmatpush1.msra.mxu0 0.0
    %414 = vmatprep.subr.mxu0 0.0
    %415 = vmatpush1.msra.mxu0 0.0
    %416 = vmatprep.subr.mxu0 0.0
    %417 = vmatpush1.msra.mxu0 0.0
    %418 = vmatprep.subr.mxu0 0.0
    %419 = vmatpush1.msra.mxu0 0.0
    %420 = vmatprep.subr.mxu0 0.0
    %421 = vmatpush1.msra.mxu0 0.0
    %422 = vmatprep.subr.mxu0 0.0
    %423 = vmatpush1.msra.mxu0 0.0
    %424 = vmatprep.subr.mxu0 0.0
    %425 = vmatpush1.msra.mxu0 0.0
    %426 = vmatprep.subr.mxu0 0.0
    %427 = vmatpush1.msra.mxu0 0.0
    %428 = vmatprep.subr.mxu0 0.0
    %429 = vmatpush1.msra.mxu0 0.0
    %430 = vmatprep.subr.mxu0 0.0
    %431 = vmatpush1.msra.mxu0 0.0
    %432 = vmatprep.subr.mxu0 0.0
    %433 = vmatpush1.msra.mxu0 0.0
    %434 = vmatprep.subr.mxu0 0.0
    %435 = vmatpush1.msra.mxu0 0.0
    %436 = vmatprep.subr.mxu0 0.0
    %437 = vmatpush1.msra.mxu0 0.0
    %438 = vmatprep.subr.mxu0 0.0
    %439 = vmatpush1.msra.mxu0 0.0
    %440 = vmatprep.subr.mxu0 0.0
    %441 = vmatpush1.msra.mxu0 %v405
    %442 = vmatprep.subr.mxu0 0.0
    %443 = vmatpush2.msra.mxu0 0.0
    %444 = vmatprep.subr.mxu0 0.0
    %445 = vmatpush2.msra.mxu0 0.0
    %446 = vmatprep.subr.mxu0 0.0
    %447 = vmatpush2.msra.mxu0 0.0
    %448 = vmatprep.subr.mxu0 0.0
    %449 = vmatpush2.msra.mxu0 0.0
    %450 = vmatprep.subr.mxu0 0.0
    %451 = vmatpush2.msra.mxu0 0.0
    %452 = vmatprep.subr.mxu0 0.0
    %453 = vmatpush2.msra.mxu0 0.0
    %454 = vmatprep.subr.mxu0 0.0
    %455 = vmatpush2.msra.mxu0 0.0
    %456 = vmatprep.subr.mxu0 0.0
    %457 = vmatpush2.msra.mxu0 0.0
    %458 = vmatprep.subr.mxu0 0.0
    %459 = vmatpush2.msra.mxu0 0.0
    %460 = vmatprep.subr.mxu0 0.0
    %461 = vmatpush2.msra.mxu0 0.0
    %462 = vmatprep.subr.mxu0 0.0
    %463 = vmatpush2.msra.mxu0 0.0
    %464 = vmatprep.subr.mxu0 0.0
    %465 = vmatpush2.msra.mxu0 0.0
    %466 = vmatprep.subr.mxu0 0.0
    %467 = vmatpush2.msra.mxu0 0.0
    %468 = vmatprep.subr.mxu0 0.0
    %469 = vmatpush2.msra.mxu0 0.0
    %470 = vmatprep.subr.mxu0 0.0
    %471 = vmatpush2.msra.mxu0 0.0
    %472 = vmatprep.subr.mxu0 0.0
    %473 = vmatpush2.msra.mxu0 0.0
    %474 = vmatprep.mubr.f32.mxu0 0.0
    %475 = vmatmul.mubr.f32.gmra.mxu0 %v408
    %v476 = vpop.f32.mrf.mxu0
    %v477 = vadd.f32 0.0, %v476
    %v478 = vpop.f32.mrf.mxu0
    %479 = vdwg.mxu0
    %480 = vrot.lane.b32.xlu0 %v222, 64
    %v481 = vpop.permute.xlu0 %480
    %v484 = vsel %vm228, %v403, 0
    %486 = vmatprep.subr.mxu0 0.0
    %487 = vmatpush1.msra.mxu0 0.0
    %488 = vmatprep.subr.mxu0 0.0
    %489 = vmatpush1.msra.mxu0 0.0
    %490 = vmatprep.subr.mxu0 0.0
    %491 = vmatpush1.msra.mxu0 0.0
    %492 = vmatprep.subr.mxu0 0.0
    %493 = vmatpush1.msra.mxu0 0.0
    %494 = vmatprep.subr.mxu0 0.0
    %495 = vmatpush1.msra.mxu0 0.0
    %496 = vmatprep.subr.mxu0 0.0
    %497 = vmatpush1.msra.mxu0 0.0
    %498 = vmatprep.subr.mxu0 0.0
    %499 = vmatpush1.msra.mxu0 0.0
    %500 = vmatprep.subr.mxu0 0.0
    %501 = vmatpush1.msra.mxu0 0.0
    %502 = vmatprep.subr.mxu0 0.0
    %503 = vmatpush1.msra.mxu0 0.0
    %504 = vmatprep.subr.mxu0 0.0
    %505 = vmatpush1.msra.mxu0 0.0
    %506 = vmatprep.subr.mxu0 0.0
    %507 = vmatpush1.msra.mxu0 0.0
    %508 = vmatprep.subr.mxu0 0.0
    %509 = vmatpush1.msra.mxu0 0.0
    %510 = vmatprep.subr.mxu0 0.0
    %511 = vmatpush1.msra.mxu0 0.0
    %512 = vmatprep.subr.mxu0 0.0
    %513 = vmatpush1.msra.mxu0 0.0
    %514 = vmatprep.subr.mxu0 0.0
    %515 = vmatpush1.msra.mxu0 0.0
    %516 = vmatprep.subr.mxu0 0.0
    %517 = vmatpush1.msra.mxu0 %v481
    %518 = vmatprep.subr.mxu0 0.0
    %519 = vmatpush2.msra.mxu0 0.0
    %520 = vmatprep.subr.mxu0 0.0
    %521 = vmatpush2.msra.mxu0 0.0
    %522 = vmatprep.subr.mxu0 0.0
    %523 = vmatpush2.msra.mxu0 0.0
    %524 = vmatprep.subr.mxu0 0.0
    %525 = vmatpush2.msra.mxu0 0.0
    %526 = vmatprep.subr.mxu0 0.0
    %527 = vmatpush2.msra.mxu0 0.0
    %528 = vmatprep.subr.mxu0 0.0
    %529 = vmatpush2.msra.mxu0 0.0
    %530 = vmatprep.subr.mxu0 0.0
    %531 = vmatpush2.msra.mxu0 0.0
    %532 = vmatprep.subr.mxu0 0.0
    %533 = vmatpush2.msra.mxu0 0.0
    %534 = vmatprep.subr.mxu0 0.0
    %535 = vmatpush2.msra.mxu0 0.0
    %536 = vmatprep.subr.mxu0 0.0
    %537 = vmatpush2.msra.mxu0 0.0
    %538 = vmatprep.subr.mxu0 0.0
    %539 = vmatpush2.msra.mxu0 0.0
    %540 = vmatprep.subr.mxu0 0.0
    %541 = vmatpush2.msra.mxu0 0.0
    %542 = vmatprep.subr.mxu0 0.0
    %543 = vmatpush2.msra.mxu0 0.0
    %544 = vmatprep.subr.mxu0 0.0
    %545 = vmatpush2.msra.mxu0 0.0
    %546 = vmatprep.subr.mxu0 0.0
    %547 = vmatpush2.msra.mxu0 0.0
    %548 = vmatprep.subr.mxu0 0.0
    %549 = vmatpush2.msra.mxu0 0.0
    %550 = vmatprep.mubr.f32.mxu0 0.0
    %551 = vmatmul.mubr.f32.gmra.mxu0 %v484
    %v552 = vpop.f32.mrf.mxu0
    %v553 = vadd.f32 0.0, %v552
    %v554 = vpop.f32.mrf.mxu0
    %555 = vdwg.mxu0
    %556 = vrot.lane.b32.xlu0 %v149, 120
    %v557 = vpop.permute.xlu0 %556
    %558 = vrot.lane.b32.xlu0 %v149, 88
    %v559 = vpop.permute.xlu0 %558
    %v560 = vsel %vm228, %v557, 0
    %v562 = vsel %vm228, %v559, 0
    %564 = vmatprep.subr.mxu0 0.0
    %565 = vmatpush1.xpose.msra.mxu0 0.0
    %566 = vmatprep.subr.mxu0 0.0
    %567 = vmatpush1.xpose.msra.mxu0 0.0
    %568 = vmatprep.subr.mxu0 0.0
    %569 = vmatpush1.xpose.msra.mxu0 0.0
    %570 = vmatprep.subr.mxu0 0.0
    %571 = vmatpush1.xpose.msra.mxu0 0.0
    %572 = vmatprep.subr.mxu0 0.0
    %573 = vmatpush1.xpose.msra.mxu0 0.0
    %574 = vmatprep.subr.mxu0 0.0
    %575 = vmatpush1.xpose.msra.mxu0 0.0
    %576 = vmatprep.subr.mxu0 0.0
    %577 = vmatpush1.xpose.msra.mxu0 0.0
    %578 = vmatprep.subr.mxu0 0.0
    %579 = vmatpush1.xpose.msra.mxu0 0.0
    %580 = vmatprep.subr.mxu0 0.0
    %581 = vmatpush1.xpose.msra.mxu0 0.0
    %582 = vmatprep.subr.mxu0 0.0
    %583 = vmatpush1.xpose.msra.mxu0 0.0
    %584 = vmatprep.subr.mxu0 0.0
    %585 = vmatpush1.xpose.msra.mxu0 0.0
    %586 = vmatprep.subr.mxu0 0.0
    %587 = vmatpush1.xpose.msra.mxu0 0.0
    %588 = vmatprep.subr.mxu0 0.0
    %589 = vmatpush1.xpose.msra.mxu0 0.0
    %590 = vmatprep.subr.mxu0 0.0
    %591 = vmatpush1.xpose.msra.mxu0 0.0
    %592 = vmatprep.subr.mxu0 0.0
    %593 = vmatpush1.xpose.msra.mxu0 0.0
    %594 = vmatprep.subr.mxu0 0.0
    %595 = vmatpush1.xpose.msra.mxu0 %v562
    %596 = vmatprep.subr.mxu0 0.0
    %597 = vmatpush2.xpose.msra.mxu0 0.0
    %598 = vmatprep.subr.mxu0 0.0
    %599 = vmatpush2.xpose.msra.mxu0 0.0
    %600 = vmatprep.subr.mxu0 0.0
    %601 = vmatpush2.xpose.msra.mxu0 0.0
    %602 = vmatprep.subr.mxu0 0.0
    %603 = vmatpush2.xpose.msra.mxu0 0.0
    %604 = vmatprep.subr.mxu0 0.0
    %605 = vmatpush2.xpose.msra.mxu0 0.0
    %606 = vmatprep.subr.mxu0 0.0
    %607 = vmatpush2.xpose.msra.mxu0 0.0
    %608 = vmatprep.subr.mxu0 0.0
    %609 = vmatpush2.xpose.msra.mxu0 0.0
    %610 = vmatprep.subr.mxu0 0.0
    %611 = vmatpush2.xpose.msra.mxu0 0.0
    %612 = vmatprep.subr.mxu0 0.0
    %613 = vmatpush2.xpose.msra.mxu0 0.0
    %614 = vmatprep.subr.mxu0 0.0
    %615 = vmatpush2.xpose.msra.mxu0 0.0
    %616 = vmatprep.subr.mxu0 0.0
    %617 = vmatpush2.xpose.msra.mxu0 0.0
    %618 = vmatprep.subr.mxu0 0.0
    %619 = vmatpush2.xpose.msra.mxu0 0.0
    %620 = vmatprep.subr.mxu0 0.0
    %621 = vmatpush2.xpose.msra.mxu0 0.0
    %622 = vmatprep.subr.mxu0 0.0
    %623 = vmatpush2.xpose.msra.mxu0 0.0
    %624 = vmatprep.subr.mxu0 0.0
    %625 = vmatpush2.xpose.msra.mxu0 0.0
    %626 = vmatprep.subr.mxu0 0.0
    %627 = vmatpush2.xpose.msra.mxu0 0.0
    %628 = vmatprep.mubr.f32.mxu0 0.0
    %629 = vmatmul.mubr.f32.gmra.mxu0 %v560
    %v630 = vpop.f32.mrf.mxu0
    %v631 = vadd.f32 0.0, %v630
    %v632 = vpop.f32.mrf.mxu0
    %633 = vdwg.mxu0
    %634 = vrot.lane.b32.xlu0 %v222, 120
    %v635 = vpop.permute.xlu0 %634
    %636 = vrot.lane.b32.xlu0 %v222, 88
    %v637 = vpop.permute.xlu0 %636
    %v638 = vsel %vm228, %v635, 0
    %v640 = vsel %vm228, %v637, 0
    %642 = vmatprep.subr.mxu0 0.0
    %643 = vmatpush1.xpose.msra.mxu0 0.0
    %644 = vmatprep.subr.mxu0 0.0
    %645 = vmatpush1.xpose.msra.mxu0 0.0
    %646 = vmatprep.subr.mxu0 0.0
    %647 = vmatpush1.xpose.msra.mxu0 0.0
    %648 = vmatprep.subr.mxu0 0.0
    %649 = vmatpush1.xpose.msra.mxu0 0.0
    %650 = vmatprep.subr.mxu0 0.0
    %651 = vmatpush1.xpose.msra.mxu0 0.0
    %652 = vmatprep.subr.mxu0 0.0
    %653 = vmatpush1.xpose.msra.mxu0 0.0
    %654 = vmatprep.subr.mxu0 0.0
    %655 = vmatpush1.xpose.msra.mxu0 0.0
    %656 = vmatprep.subr.mxu0 0.0
    %657 = vmatpush1.xpose.msra.mxu0 0.0
    %658 = vmatprep.subr.mxu0 0.0
    %659 = vmatpush1.xpose.msra.mxu0 0.0
    %660 = vmatprep.subr.mxu0 0.0
    %661 = vmatpush1.xpose.msra.mxu0 0.0
    %662 = vmatprep.subr.mxu0 0.0
    %663 = vmatpush1.xpose.msra.mxu0 0.0
    %664 = vmatprep.subr.mxu0 0.0
    %665 = vmatpush1.xpose.msra.mxu0 0.0
    %666 = vmatprep.subr.mxu0 0.0
    %667 = vmatpush1.xpose.msra.mxu0 0.0
    %668 = vmatprep.subr.mxu0 0.0
    %669 = vmatpush1.xpose.msra.mxu0 0.0
    %670 = vmatprep.subr.mxu0 0.0
    %671 = vmatpush1.xpose.msra.mxu0 0.0
    %672 = vmatprep.subr.mxu0 0.0
    %673 = vmatpush1.xpose.msra.mxu0 %v640
    %674 = vmatprep.subr.mxu0 0.0
    %675 = vmatpush2.xpose.msra.mxu0 0.0
    %676 = vmatprep.subr.mxu0 0.0
    %677 = vmatpush2.xpose.msra.mxu0 0.0
    %678 = vmatprep.subr.mxu0 0.0
    %679 = vmatpush2.xpose.msra.mxu0 0.0
    %680 = vmatprep.subr.mxu0 0.0
    %681 = vmatpush2.xpose.msra.mxu0 0.0
    %682 = vmatprep.subr.mxu0 0.0
    %683 = vmatpush2.xpose.msra.mxu0 0.0
    %684 = vmatprep.subr.mxu0 0.0
    %685 = vmatpush2.xpose.msra.mxu0 0.0
    %686 = vmatprep.subr.mxu0 0.0
    %687 = vmatpush2.xpose.msra.mxu0 0.0
    %688 = vmatprep.subr.mxu0 0.0
    %689 = vmatpush2.xpose.msra.mxu0 0.0
    %690 = vmatprep.subr.mxu0 0.0
    %691 = vmatpush2.xpose.msra.mxu0 0.0
    %692 = vmatprep.subr.mxu0 0.0
    %693 = vmatpush2.xpose.msra.mxu0 0.0
    %694 = vmatprep.subr.mxu0 0.0
    %695 = vmatpush2.xpose.msra.mxu0 0.0
    %696 = vmatprep.subr.mxu0 0.0
    %697 = vmatpush2.xpose.msra.mxu0 0.0
    %698 = vmatprep.subr.mxu0 0.0
    %699 = vmatpush2.xpose.msra.mxu0 0.0
    %700 = vmatprep.subr.mxu0 0.0
    %701 = vmatpush2.xpose.msra.mxu0 0.0
    %702 = vmatprep.subr.mxu0 0.0
    %703 = vmatpush2.xpose.msra.mxu0 0.0
    %704 = vmatprep.subr.mxu0 0.0
    %705 = vmatpush2.xpose.msra.mxu0 0.0
    %706 = vmatprep.mubr.f32.mxu0 0.0
    %707 = vmatmul.mubr.f32.gmra.mxu0 %v638
    %v708 = vpop.f32.mrf.mxu0
    %v709 = vadd.f32 0.0, %v708
    %v710 = vpop.f32.mrf.mxu0
    %711 = vdwg.mxu0
    %v712 = vmul.f32 %v631, 0.35355338
    %v713 = vmul.f32 %v709, 0.35355338
    %v714 = vsel %vm228, %v712, -inf
    %715 = vmax.xlane.f32.xlu0 %v714
    %v716 = vpop.xlane.xlu0 %715
    %v717 = vsel %vm228, %v713, -inf
    %718 = vmax.xlane.f32.xlu0 %v717
    %v719 = vpop.xlane.xlu0 %718
    %v720 = vsub.f32 %v712, %v716
    %v721 = vsub.f32 %v713, %v719
    %v722 = vmul.f32 %v720, 1.442695
    %v723 = vpow.pop %v722
    %v724 = vmul.f32 %v721, 1.442695
    %v725 = vpow.pop %v724
    %v726 = vsel %vm228, %v723, 0.0
    %727 = vadd.xlane.f32.xlu0 %v726
    %v728 = vpop.xlane.xlu0 %727
    %v729 = vsel %vm228, %v725, 0.0
    %730 = vadd.xlane.f32.xlu0 %v729
    %v731 = vpop.xlane.xlu0 %730
    %v732 = vrcp.pop %v728
    %v733 = vrcp.pop %v731
    %v734 = vmul.f32 %v723, %v732
    %v735 = vmul.f32 %v725, %v733
    %736 = vrot.lane.b32.xlu0 %v149, 56
    %v737 = vpop.permute.xlu0 %736
    %v740 = vsel %vm228, %v734, 0
    %742 = vmatprep.subr.mxu0 0.0
    %743 = vmatpush1.msra.mxu0 0.0
    %744 = vmatprep.subr.mxu0 0.0
    %745 = vmatpush1.msra.mxu0 0.0
    %746 = vmatprep.subr.mxu0 0.0
    %747 = vmatpush1.msra.mxu0 0.0
    %748 = vmatprep.subr.mxu0 0.0
    %749 = vmatpush1.msra.mxu0 0.0
    %750 = vmatprep.subr.mxu0 0.0
    %751 = vmatpush1.msra.mxu0 0.0
    %752 = vmatprep.subr.mxu0 0.0
    %753 = vmatpush1.msra.mxu0 0.0
    %754 = vmatprep.subr.mxu0 0.0
    %755 = vmatpush1.msra.mxu0 0.0
    %756 = vmatprep.subr.mxu0 0.0
    %757 = vmatpush1.msra.mxu0 0.0
    %758 = vmatprep.subr.mxu0 0.0
    %759 = vmatpush1.msra.mxu0 0.0
    %760 = vmatprep.subr.mxu0 0.0
    %761 = vmatpush1.msra.mxu0 0.0
    %762 = vmatprep.subr.mxu0 0.0
    %763 = vmatpush1.msra.mxu0 0.0
    %764 = vmatprep.subr.mxu0 0.0
    %765 = vmatpush1.msra.mxu0 0.0
    %766 = vmatprep.subr.mxu0 0.0
    %767 = vmatpush1.msra.mxu0 0.0
    %768 = vmatprep.subr.mxu0 0.0
    %769 = vmatpush1.msra.mxu0 0.0
    %770 = vmatprep.subr.mxu0 0.0
    %771 = vmatpush1.msra.mxu0 0.0
    %772 = vmatprep.subr.mxu0 0.0
    %773 = vmatpush1.msra.mxu0 %v737
    %774 = vmatprep.subr.mxu0 0.0
    %775 = vmatpush2.msra.mxu0 0.0
    %776 = vmatprep.subr.mxu0 0.0
    %777 = vmatpush2.msra.mxu0 0.0
    %778 = vmatprep.subr.mxu0 0.0
    %779 = vmatpush2.msra.mxu0 0.0
    %780 = vmatprep.subr.mxu0 0.0
    %781 = vmatpush2.msra.mxu0 0.0
    %782 = vmatprep.subr.mxu0 0.0
    %783 = vmatpush2.msra.mxu0 0.0
    %784 = vmatprep.subr.mxu0 0.0
    %785 = vmatpush2.msra.mxu0 0.0
    %786 = vmatprep.subr.mxu0 0.0
    %787 = vmatpush2.msra.mxu0 0.0
    %788 = vmatprep.subr.mxu0 0.0
    %789 = vmatpush2.msra.mxu0 0.0
    %790 = vmatprep.subr.mxu0 0.0
    %791 = vmatpush2.msra.mxu0 0.0
    %792 = vmatprep.subr.mxu0 0.0
    %793 = vmatpush2.msra.mxu0 0.0
    %794 = vmatprep.subr.mxu0 0.0
    %795 = vmatpush2.msra.mxu0 0.0
    %796 = vmatprep.subr.mxu0 0.0
    %797 = vmatpush2.msra.mxu0 0.0
    %798 = vmatprep.subr.mxu0 0.0
    %799 = vmatpush2.msra.mxu0 0.0
    %800 = vmatprep.subr.mxu0 0.0
    %801 = vmatpush2.msra.mxu0 0.0
    %802 = vmatprep.subr.mxu0 0.0
    %803 = vmatpush2.msra.mxu0 0.0
    %804 = vmatprep.subr.mxu0 0.0
    %805 = vmatpush2.msra.mxu0 0.0
    %806 = vmatprep.mubr.f32.mxu0 0.0
    %807 = vmatmul.mubr.f32.gmra.mxu0 %v740
    %v808 = vpop.f32.mrf.mxu0
    %v809 = vadd.f32 0.0, %v808
    %v810 = vpop.f32.mrf.mxu0
    %811 = vdwg.mxu0
    %812 = vrot.lane.b32.xlu0 %v222, 56
    %v813 = vpop.permute.xlu0 %812
    %v816 = vsel %vm228, %v735, 0
    %818 = vmatprep.subr.mxu0 0.0
    %819 = vmatpush1.msra.mxu0 0.0
    %820 = vmatprep.subr.mxu0 0.0
    %821 = vmatpush1.msra.mxu0 0.0
    %822 = vmatprep.subr.mxu0 0.0
    %823 = vmatpush1.msra.mxu0 0.0
    %824 = vmatprep.subr.mxu0 0.0
    %825 = vmatpush1.msra.mxu0 0.0
    %826 = vmatprep.subr.mxu0 0.0
    %827 = vmatpush1.msra.mxu0 0.0
    %828 = vmatprep.subr.mxu0 0.0
    %829 = vmatpush1.msra.mxu0 0.0
    %830 = vmatprep.subr.mxu0 0.0
    %831 = vmatpush1.msra.mxu0 0.0
    %832 = vmatprep.subr.mxu0 0.0
    %833 = vmatpush1.msra.mxu0 0.0
    %834 = vmatprep.subr.mxu0 0.0
    %835 = vmatpush1.msra.mxu0 0.0
    %836 = vmatprep.subr.mxu0 0.0
    %837 = vmatpush1.msra.mxu0 0.0
    %838 = vmatprep.subr.mxu0 0.0
    %839 = vmatpush1.msra.mxu0 0.0
    %840 = vmatprep.subr.mxu0 0.0
    %841 = vmatpush1.msra.mxu0 0.0
    %842 = vmatprep.subr.mxu0 0.0
    %843 = vmatpush1.msra.mxu0 0.0
    %844 = vmatprep.subr.mxu0 0.0
    %845 = vmatpush1.msra.mxu0 0.0
    %846 = vmatprep.subr.mxu0 0.0
    %847 = vmatpush1.msra.mxu0 0.0
    %848 = vmatprep.subr.mxu0 0.0
    %849 = vmatpush1.msra.mxu0 %v813
    %850 = vmatprep.subr.mxu0 0.0
    %851 = vmatpush2.msra.mxu0 0.0
    %852 = vmatprep.subr.mxu0 0.0
    %853 = vmatpush2.msra.mxu0 0.0
    %854 = vmatprep.subr.mxu0 0.0
    %855 = vmatpush2.msra.mxu0 0.0
    %856 = vmatprep.subr.mxu0 0.0
    %857 = vmatpush2.msra.mxu0 0.0
    %858 = vmatprep.subr.mxu0 0.0
    %859 = vmatpush2.msra.mxu0 0.0
    %860 = vmatprep.subr.mxu0 0.0
    %861 = vmatpush2.msra.mxu0 0.0
    %862 = vmatprep.subr.mxu0 0.0
    %863 = vmatpush2.msra.mxu0 0.0
    %864 = vmatprep.subr.mxu0 0.0
    %865 = vmatpush2.msra.mxu0 0.0
    %866 = vmatprep.subr.mxu0 0.0
    %867 = vmatpush2.msra.mxu0 0.0
    %868 = vmatprep.subr.mxu0 0.0
    %869 = vmatpush2.msra.mxu0 0.0
    %870 = vmatprep.subr.mxu0 0.0
    %871 = vmatpush2.msra.mxu0 0.0
    %872 = vmatprep.subr.mxu0 0.0
    %873 = vmatpush2.msra.mxu0 0.0
    %874 = vmatprep.subr.mxu0 0.0
    %875 = vmatpush2.msra.mxu0 0.0
    %876 = vmatprep.subr.mxu0 0.0
    %877 = vmatpush2.msra.mxu0 0.0
    %878 = vmatprep.subr.mxu0 0.0
    %879 = vmatpush2.msra.mxu0 0.0
    %880 = vmatprep.subr.mxu0 0.0
    %881 = vmatpush2.msra.mxu0 0.0
    %882 = vmatprep.mubr.f32.mxu0 0.0
    %883 = vmatmul.mubr.f32.gmra.mxu0 %v816
    %v884 = vpop.f32.mrf.mxu0
    %v885 = vadd.f32 0.0, %v884
    %v886 = vpop.f32.mrf.mxu0
    %887 = vdwg.mxu0
    %888 = vrot.lane.b32.xlu0 %v149, 112
    %v889 = vpop.permute.xlu0 %888
    %890 = vrot.lane.b32.xlu0 %v149, 80
    %v891 = vpop.permute.xlu0 %890
    %v892 = vsel %vm228, %v889, 0
    %v894 = vsel %vm228, %v891, 0
    %896 = vmatprep.subr.mxu0 0.0
    %897 = vmatpush1.xpose.msra.mxu0 0.0
    %898 = vmatprep.subr.mxu0 0.0
    %899 = vmatpush1.xpose.msra.mxu0 0.0
    %900 = vmatprep.subr.mxu0 0.0
    %901 = vmatpush1.xpose.msra.mxu0 0.0
    %902 = vmatprep.subr.mxu0 0.0
    %903 = vmatpush1.xpose.msra.mxu0 0.0
    %904 = vmatprep.subr.mxu0 0.0
    %905 = vmatpush1.xpose.msra.mxu0 0.0
    %906 = vmatprep.subr.mxu0 0.0
    %907 = vmatpush1.xpose.msra.mxu0 0.0
    %908 = vmatprep.subr.mxu0 0.0
    %909 = vmatpush1.xpose.msra.mxu0 0.0
    %910 = vmatprep.subr.mxu0 0.0
    %911 = vmatpush1.xpose.msra.mxu0 0.0
    %912 = vmatprep.subr.mxu0 0.0
    %913 = vmatpush1.xpose.msra.mxu0 0.0
    %914 = vmatprep.subr.mxu0 0.0
    %915 = vmatpush1.xpose.msra.mxu0 0.0
    %916 = vmatprep.subr.mxu0 0.0
    %917 = vmatpush1.xpose.msra.mxu0 0.0
    %918 = vmatprep.subr.mxu0 0.0
    %919 = vmatpush1.xpose.msra.mxu0 0.0
    %920 = vmatprep.subr.mxu0 0.0
    %921 = vmatpush1.xpose.msra.mxu0 0.0
    %922 = vmatprep.subr.mxu0 0.0
    %923 = vmatpush1.xpose.msra.mxu0 0.0
    %924 = vmatprep.subr.mxu0 0.0
    %925 = vmatpush1.xpose.msra.mxu0 0.0
    %926 = vmatprep.subr.mxu0 0.0
    %927 = vmatpush1.xpose.msra.mxu0 %v894
    %928 = vmatprep.subr.mxu0 0.0
    %929 = vmatpush2.xpose.msra.mxu0 0.0
    %930 = vmatprep.subr.mxu0 0.0
    %931 = vmatpush2.xpose.msra.mxu0 0.0
    %932 = vmatprep.subr.mxu0 0.0
    %933 = vmatpush2.xpose.msra.mxu0 0.0
    %934 = vmatprep.subr.mxu0 0.0
    %935 = vmatpush2.xpose.msra.mxu0 0.0
    %936 = vmatprep.subr.mxu0 0.0
    %937 = vmatpush2.xpose.msra.mxu0 0.0
    %938 = vmatprep.subr.mxu0 0.0
    %939 = vmatpush2.xpose.msra.mxu0 0.0
    %940 = vmatprep.subr.mxu0 0.0
    %941 = vmatpush2.xpose.msra.mxu0 0.0
    %942 = vmatprep.subr.mxu0 0.0
    %943 = vmatpush2.xpose.msra.mxu0 0.0
    %944 = vmatprep.subr.mxu0 0.0
    %945 = vmatpush2.xpose.msra.mxu0 0.0
    %946 = vmatprep.subr.mxu0 0.0
    %947 = vmatpush2.xpose.msra.mxu0 0.0
    %948 = vmatprep.subr.mxu0 0.0
    %949 = vmatpush2.xpose.msra.mxu0 0.0
    %950 = vmatprep.subr.mxu0 0.0
    %951 = vmatpush2.xpose.msra.mxu0 0.0
    %952 = vmatprep.subr.mxu0 0.0
    %953 = vmatpush2.xpose.msra.mxu0 0.0
    %954 = vmatprep.subr.mxu0 0.0
    %955 = vmatpush2.xpose.msra.mxu0 0.0
    %956 = vmatprep.subr.mxu0 0.0
    %957 = vmatpush2.xpose.msra.mxu0 0.0
    %958 = vmatprep.subr.mxu0 0.0
    %959 = vmatpush2.xpose.msra.mxu0 0.0
    %960 = vmatprep.mubr.f32.mxu0 0.0
    %961 = vmatmul.mubr.f32.gmra.mxu0 %v892
    %v962 = vpop.f32.mrf.mxu0
    %v963 = vadd.f32 0.0, %v962
    %v964 = vpop.f32.mrf.mxu0
    %965 = vdwg.mxu0
    %966 = vrot.lane.b32.xlu0 %v222, 112
    %v967 = vpop.permute.xlu0 %966
    %968 = vrot.lane.b32.xlu0 %v222, 80
    %v969 = vpop.permute.xlu0 %968
    %v970 = vsel %vm228, %v967, 0
    %v972 = vsel %vm228, %v969, 0
    %974 = vmatprep.subr.mxu0 0.0
    %975 = vmatpush1.xpose.msra.mxu0 0.0
    %976 = vmatprep.subr.mxu0 0.0
    %977 = vmatpush1.xpose.msra.mxu0 0.0
    %978 = vmatprep.subr.mxu0 0.0
    %979 = vmatpush1.xpose.msra.mxu0 0.0
    %980 = vmatprep.subr.mxu0 0.0
    %981 = vmatpush1.xpose.msra.mxu0 0.0
    %982 = vmatprep.subr.mxu0 0.0
    %983 = vmatpush1.xpose.msra.mxu0 0.0
    %984 = vmatprep.subr.mxu0 0.0
    %985 = vmatpush1.xpose.msra.mxu0 0.0
    %986 = vmatprep.subr.mxu0 0.0
    %987 = vmatpush1.xpose.msra.mxu0 0.0
    %988 = vmatprep.subr.mxu0 0.0
    %989 = vmatpush1.xpose.msra.mxu0 0.0
    %990 = vmatprep.subr.mxu0 0.0
    %991 = vmatpush1.xpose.msra.mxu0 0.0
    %992 = vmatprep.subr.mxu0 0.0
    %993 = vmatpush1.xpose.msra.mxu0 0.0
    %994 = vmatprep.subr.mxu0 0.0
    %995 = vmatpush1.xpose.msra.mxu0 0.0
    %996 = vmatprep.subr.mxu0 0.0
    %997 = vmatpush1.xpose.msra.mxu0 0.0
    %998 = vmatprep.subr.mxu0 0.0
    %999 = vmatpush1.xpose.msra.mxu0 0.0
    %1000 = vmatprep.subr.mxu0 0.0
    %1001 = vmatpush1.xpose.msra.mxu0 0.0
    %1002 = vmatprep.subr.mxu0 0.0
    %1003 = vmatpush1.xpose.msra.mxu0 0.0
    %1004 = vmatprep.subr.mxu0 0.0
    %1005 = vmatpush1.xpose.msra.mxu0 %v972
    %1006 = vmatprep.subr.mxu0 0.0
    %1007 = vmatpush2.xpose.msra.mxu0 0.0
    %1008 = vmatprep.subr.mxu0 0.0
    %1009 = vmatpush2.xpose.msra.mxu0 0.0
    %1010 = vmatprep.subr.mxu0 0.0
    %1011 = vmatpush2.xpose.msra.mxu0 0.0
    %1012 = vmatprep.subr.mxu0 0.0
    %1013 = vmatpush2.xpose.msra.mxu0 0.0
    %1014 = vmatprep.subr.mxu0 0.0
    %1015 = vmatpush2.xpose.msra.mxu0 0.0
    %1016 = vmatprep.subr.mxu0 0.0
    %1017 = vmatpush2.xpose.msra.mxu0 0.0
    %1018 = vmatprep.subr.mxu0 0.0
    %1019 = vmatpush2.xpose.msra.mxu0 0.0
    %1020 = vmatprep.subr.mxu0 0.0
    %1021 = vmatpush2.xpose.msra.mxu0 0.0
    %1022 = vmatprep.subr.mxu0 0.0
    %1023 = vmatpush2.xpose.msra.mxu0 0.0
    %1024 = vmatprep.subr.mxu0 0.0
    %1025 = vmatpush2.xpose.msra.mxu0 0.0
    %1026 = vmatprep.subr.mxu0 0.0
    %1027 = vmatpush2.xpose.msra.mxu0 0.0
    %1028 = vmatprep.subr.mxu0 0.0
    %1029 = vmatpush2.xpose.msra.mxu0 0.0
    %1030 = vmatprep.subr.mxu0 0.0
    %1031 = vmatpush2.xpose.msra.mxu0 0.0
    %1032 = vmatprep.subr.mxu0 0.0
    %1033 = vmatpush2.xpose.msra.mxu0 0.0
    %1034 = vmatprep.subr.mxu0 0.0
    %1035 = vmatpush2.xpose.msra.mxu0 0.0
    %1036 = vmatprep.subr.mxu0 0.0
    %1037 = vmatpush2.xpose.msra.mxu0 0.0
    %1038 = vmatprep.mubr.f32.mxu0 0.0
    %1039 = vmatmul.mubr.f32.gmra.mxu0 %v970
    %v1040 = vpop.f32.mrf.mxu0
    %v1041 = vadd.f32 0.0, %v1040
    %v1042 = vpop.f32.mrf.mxu0
    %1043 = vdwg.mxu0
    %v1044 = vmul.f32 %v963, 0.35355338
    %v1045 = vmul.f32 %v1041, 0.35355338
    %v1046 = vsel %vm228, %v1044, -inf
    %1047 = vmax.xlane.f32.xlu0 %v1046
    %v1048 = vpop.xlane.xlu0 %1047
    %v1049 = vsel %vm228, %v1045, -inf
    %1050 = vmax.xlane.f32.xlu0 %v1049
    %v1051 = vpop.xlane.xlu0 %1050
    %v1052 = vsub.f32 %v1044, %v1048
    %v1053 = vsub.f32 %v1045, %v1051
    %v1054 = vmul.f32 %v1052, 1.442695
    %v1055 = vpow.pop %v1054
    %v1056 = vmul.f32 %v1053, 1.442695
    %v1057 = vpow.pop %v1056
    %v1058 = vsel %vm228, %v1055, 0.0
    %1059 = vadd.xlane.f32.xlu0 %v1058
    %v1060 = vpop.xlane.xlu0 %1059
    %v1061 = vsel %vm228, %v1057, 0.0
    %1062 = vadd.xlane.f32.xlu0 %v1061
    %v1063 = vpop.xlane.xlu0 %1062
    %v1064 = vrcp.pop %v1060
    %v1065 = vrcp.pop %v1063
    %v1066 = vmul.f32 %v1055, %v1064
    %v1067 = vmul.f32 %v1057, %v1065
    %1068 = vrot.lane.b32.xlu0 %v149, 48
    %v1069 = vpop.permute.xlu0 %1068
    %v1072 = vsel %vm228, %v1066, 0
    %1074 = vmatprep.subr.mxu0 0.0
    %1075 = vmatpush1.msra.mxu0 0.0
    %1076 = vmatprep.subr.mxu0 0.0
    %1077 = vmatpush1.msra.mxu0 0.0
    %1078 = vmatprep.subr.mxu0 0.0
    %1079 = vmatpush1.msra.mxu0 0.0
    %1080 = vmatprep.subr.mxu0 0.0
    %1081 = vmatpush1.msra.mxu0 0.0
    %1082 = vmatprep.subr.mxu0 0.0
    %1083 = vmatpush1.msra.mxu0 0.0
    %1084 = vmatprep.subr.mxu0 0.0
    %1085 = vmatpush1.msra.mxu0 0.0
    %1086 = vmatprep.subr.mxu0 0.0
    %1087 = vmatpush1.msra.mxu0 0.0
    %1088 = vmatprep.subr.mxu0 0.0
    %1089 = vmatpush1.msra.mxu0 0.0
    %1090 = vmatprep.subr.mxu0 0.0
    %1091 = vmatpush1.msra.mxu0 0.0
    %1092 = vmatprep.subr.mxu0 0.0
    %1093 = vmatpush1.msra.mxu0 0.0
    %1094 = vmatprep.subr.mxu0 0.0
    %1095 = vmatpush1.msra.mxu0 0.0
    %1096 = vmatprep.subr.mxu0 0.0
    %1097 = vmatpush1.msra.mxu0 0.0
    %1098 = vmatprep.subr.mxu0 0.0
    %1099 = vmatpush1.msra.mxu0 0.0
    %1100 = vmatprep.subr.mxu0 0.0
    %1101 = vmatpush1.msra.mxu0 0.0
    %1102 = vmatprep.subr.mxu0 0.0
    %1103 = vmatpush1.msra.mxu0 0.0
    %1104 = vmatprep.subr.mxu0 0.0
    %1105 = vmatpush1.msra.mxu0 %v1069
    %1106 = vmatprep.subr.mxu0 0.0
    %1107 = vmatpush2.msra.mxu0 0.0
    %1108 = vmatprep.subr.mxu0 0.0
    %1109 = vmatpush2.msra.mxu0 0.0
    %1110 = vmatprep.subr.mxu0 0.0
    %1111 = vmatpush2.msra.mxu0 0.0
    %1112 = vmatprep.subr.mxu0 0.0
    %1113 = vmatpush2.msra.mxu0 0.0
    %1114 = vmatprep.subr.mxu0 0.0
    %1115 = vmatpush2.msra.mxu0 0.0
    %1116 = vmatprep.subr.mxu0 0.0
    %1117 = vmatpush2.msra.mxu0 0.0
    %1118 = vmatprep.subr.mxu0 0.0
    %1119 = vmatpush2.msra.mxu0 0.0
    %1120 = vmatprep.subr.mxu0 0.0
    %1121 = vmatpush2.msra.mxu0 0.0
    %1122 = vmatprep.subr.mxu0 0.0
    %1123 = vmatpush2.msra.mxu0 0.0
    %1124 = vmatprep.subr.mxu0 0.0
    %1125 = vmatpush2.msra.mxu0 0.0
    %1126 = vmatprep.subr.mxu0 0.0
    %1127 = vmatpush2.msra.mxu0 0.0
    %1128 = vmatprep.subr.mxu0 0.0
    %1129 = vmatpush2.msra.mxu0 0.0
    %1130 = vmatprep.subr.mxu0 0.0
    %1131 = vmatpush2.msra.mxu0 0.0
    %1132 = vmatprep.subr.mxu0 0.0
    %1133 = vmatpush2.msra.mxu0 0.0
    %1134 = vmatprep.subr.mxu0 0.0
    %1135 = vmatpush2.msra.mxu0 0.0
    %1136 = vmatprep.subr.mxu0 0.0
    %1137 = vmatpush2.msra.mxu0 0.0
    %1138 = vmatprep.mubr.f32.mxu0 0.0
    %1139 = vmatmul.mubr.f32.gmra.mxu0 %v1072
    %v1140 = vpop.f32.mrf.mxu0
    %v1141 = vadd.f32 0.0, %v1140
    %v1142 = vpop.f32.mrf.mxu0
    %1143 = vdwg.mxu0
    %1144 = vrot.lane.b32.xlu0 %v222, 48
    %v1145 = vpop.permute.xlu0 %1144
    %v1148 = vsel %vm228, %v1067, 0
    %1150 = vmatprep.subr.mxu0 0.0
    %1151 = vmatpush1.msra.mxu0 0.0
    %1152 = vmatprep.subr.mxu0 0.0
    %1153 = vmatpush1.msra.mxu0 0.0
    %1154 = vmatprep.subr.mxu0 0.0
    %1155 = vmatpush1.msra.mxu0 0.0
    %1156 = vmatprep.subr.mxu0 0.0
    %1157 = vmatpush1.msra.mxu0 0.0
    %1158 = vmatprep.subr.mxu0 0.0
    %1159 = vmatpush1.msra.mxu0 0.0
    %1160 = vmatprep.subr.mxu0 0.0
    %1161 = vmatpush1.msra.mxu0 0.0
    %1162 = vmatprep.subr.mxu0 0.0
    %1163 = vmatpush1.msra.mxu0 0.0
    %1164 = vmatprep.subr.mxu0 0.0
    %1165 = vmatpush1.msra.mxu0 0.0
    %1166 = vmatprep.subr.mxu0 0.0
    %1167 = vmatpush1.msra.mxu0 0.0
    %1168 = vmatprep.subr.mxu0 0.0
    %1169 = vmatpush1.msra.mxu0 0.0
    %1170 = vmatprep.subr.mxu0 0.0
    %1171 = vmatpush1.msra.mxu0 0.0
    %1172 = vmatprep.subr.mxu0 0.0
    %1173 = vmatpush1.msra.mxu0 0.0
    %1174 = vmatprep.subr.mxu0 0.0
    %1175 = vmatpush1.msra.mxu0 0.0
    %1176 = vmatprep.subr.mxu0 0.0
    %1177 = vmatpush1.msra.mxu0 0.0
    %1178 = vmatprep.subr.mxu0 0.0
    %1179 = vmatpush1.msra.mxu0 0.0
    %1180 = vmatprep.subr.mxu0 0.0
    %1181 = vmatpush1.msra.mxu0 %v1145
    %1182 = vmatprep.subr.mxu0 0.0
    %1183 = vmatpush2.msra.mxu0 0.0
    %1184 = vmatprep.subr.mxu0 0.0
    %1185 = vmatpush2.msra.mxu0 0.0
    %1186 = vmatprep.subr.mxu0 0.0
    %1187 = vmatpush2.msra.mxu0 0.0
    %1188 = vmatprep.subr.mxu0 0.0
    %1189 = vmatpush2.msra.mxu0 0.0
    %1190 = vmatprep.subr.mxu0 0.0
    %1191 = vmatpush2.msra.mxu0 0.0
    %1192 = vmatprep.subr.mxu0 0.0
    %1193 = vmatpush2.msra.mxu0 0.0
    %1194 = vmatprep.subr.mxu0 0.0
    %1195 = vmatpush2.msra.mxu0 0.0
    %1196 = vmatprep.subr.mxu0 0.0
    %1197 = vmatpush2.msra.mxu0 0.0
    %1198 = vmatprep.subr.mxu0 0.0
    %1199 = vmatpush2.msra.mxu0 0.0
    %1200 = vmatprep.subr.mxu0 0.0
    %1201 = vmatpush2.msra.mxu0 0.0
    %1202 = vmatprep.subr.mxu0 0.0
    %1203 = vmatpush2.msra.mxu0 0.0
    %1204 = vmatprep.subr.mxu0 0.0
    %1205 = vmatpush2.msra.mxu0 0.0
    %1206 = vmatprep.subr.mxu0 0.0
    %1207 = vmatpush2.msra.mxu0 0.0
    %1208 = vmatprep.subr.mxu0 0.0
    %1209 = vmatpush2.msra.mxu0 0.0
    %1210 = vmatprep.subr.mxu0 0.0
    %1211 = vmatpush2.msra.mxu0 0.0
    %1212 = vmatprep.subr.mxu0 0.0
    %1213 = vmatpush2.msra.mxu0 0.0
    %1214 = vmatprep.mubr.f32.mxu0 0.0
    %1215 = vmatmul.mubr.f32.gmra.mxu0 %v1148
    %v1216 = vpop.f32.mrf.mxu0
    %v1217 = vadd.f32 0.0, %v1216
    %v1218 = vpop.f32.mrf.mxu0
    %1219 = vdwg.mxu0
    %1220 = vrot.lane.b32.xlu0 %v149, 104
    %v1221 = vpop.permute.xlu0 %1220
    %1222 = vrot.lane.b32.xlu0 %v149, 72
    %v1223 = vpop.permute.xlu0 %1222
    %v1224 = vsel %vm228, %v1221, 0
    %v1226 = vsel %vm228, %v1223, 0
    %1228 = vmatprep.subr.mxu0 0.0
    %1229 = vmatpush1.xpose.msra.mxu0 0.0
    %1230 = vmatprep.subr.mxu0 0.0
    %1231 = vmatpush1.xpose.msra.mxu0 0.0
    %1232 = vmatprep.subr.mxu0 0.0
    %1233 = vmatpush1.xpose.msra.mxu0 0.0
    %1234 = vmatprep.subr.mxu0 0.0
    %1235 = vmatpush1.xpose.msra.mxu0 0.0
    %1236 = vmatprep.subr.mxu0 0.0
    %1237 = vmatpush1.xpose.msra.mxu0 0.0
    %1238 = vmatprep.subr.mxu0 0.0
    %1239 = vmatpush1.xpose.msra.mxu0 0.0
    %1240 = vmatprep.subr.mxu0 0.0
    %1241 = vmatpush1.xpose.msra.mxu0 0.0
    %1242 = vmatprep.subr.mxu0 0.0
    %1243 = vmatpush1.xpose.msra.mxu0 0.0
    %1244 = vmatprep.subr.mxu0 0.0
    %1245 = vmatpush1.xpose.msra.mxu0 0.0
    %1246 = vmatprep.subr.mxu0 0.0
    %1247 = vmatpush1.xpose.msra.mxu0 0.0
    %1248 = vmatprep.subr.mxu0 0.0
    %1249 = vmatpush1.xpose.msra.mxu0 0.0
    %1250 = vmatprep.subr.mxu0 0.0
    %1251 = vmatpush1.xpose.msra.mxu0 0.0
    %1252 = vmatprep.subr.mxu0 0.0
    %1253 = vmatpush1.xpose.msra.mxu0 0.0
    %1254 = vmatprep.subr.mxu0 0.0
    %1255 = vmatpush1.xpose.msra.mxu0 0.0
    %1256 = vmatprep.subr.mxu0 0.0
    %1257 = vmatpush1.xpose.msra.mxu0 0.0
    %1258 = vmatprep.subr.mxu0 0.0
    %1259 = vmatpush1.xpose.msra.mxu0 %v1226
    %1260 = vmatprep.subr.mxu0 0.0
    %1261 = vmatpush2.xpose.msra.mxu0 0.0
    %1262 = vmatprep.subr.mxu0 0.0
    %1263 = vmatpush2.xpose.msra.mxu0 0.0
    %1264 = vmatprep.subr.mxu0 0.0
    %1265 = vmatpush2.xpose.msra.mxu0 0.0
    %1266 = vmatprep.subr.mxu0 0.0
    %1267 = vmatpush2.xpose.msra.mxu0 0.0
    %1268 = vmatprep.subr.mxu0 0.0
    %1269 = vmatpush2.xpose.msra.mxu0 0.0
    %1270 = vmatprep.subr.mxu0 0.0
    %1271 = vmatpush2.xpose.msra.mxu0 0.0
    %1272 = vmatprep.subr.mxu0 0.0
    %1273 = vmatpush2.xpose.msra.mxu0 0.0
    %1274 = vmatprep.subr.mxu0 0.0
    %1275 = vmatpush2.xpose.msra.mxu0 0.0
    %1276 = vmatprep.subr.mxu0 0.0
    %1277 = vmatpush2.xpose.msra.mxu0 0.0
    %1278 = vmatprep.subr.mxu0 0.0
    %1279 = vmatpush2.xpose.msra.mxu0 0.0
    %1280 = vmatprep.subr.mxu0 0.0
    %1281 = vmatpush2.xpose.msra.mxu0 0.0
    %1282 = vmatprep.subr.mxu0 0.0
    %1283 = vmatpush2.xpose.msra.mxu0 0.0
    %1284 = vmatprep.subr.mxu0 0.0
    %1285 = vmatpush2.xpose.msra.mxu0 0.0
    %1286 = vmatprep.subr.mxu0 0.0
    %1287 = vmatpush2.xpose.msra.mxu0 0.0
    %1288 = vmatprep.subr.mxu0 0.0
    %1289 = vmatpush2.xpose.msra.mxu0 0.0
    %1290 = vmatprep.subr.mxu0 0.0
    %1291 = vmatpush2.xpose.msra.mxu0 0.0
    %1292 = vmatprep.mubr.f32.mxu0 0.0
    %1293 = vmatmul.mubr.f32.gmra.mxu0 %v1224
    %v1294 = vpop.f32.mrf.mxu0
    %v1295 = vadd.f32 0.0, %v1294
    %v1296 = vpop.f32.mrf.mxu0
    %1297 = vdwg.mxu0
    %1298 = vrot.lane.b32.xlu0 %v222, 104
    %v1299 = vpop.permute.xlu0 %1298
    %1300 = vrot.lane.b32.xlu0 %v222, 72
    %v1301 = vpop.permute.xlu0 %1300
    %v1302 = vsel %vm228, %v1299, 0
    %v1304 = vsel %vm228, %v1301, 0
    %1306 = vmatprep.subr.mxu0 0.0
    %1307 = vmatpush1.xpose.msra.mxu0 0.0
    %1308 = vmatprep.subr.mxu0 0.0
    %1309 = vmatpush1.xpose.msra.mxu0 0.0
    %1310 = vmatprep.subr.mxu0 0.0
    %1311 = vmatpush1.xpose.msra.mxu0 0.0
    %1312 = vmatprep.subr.mxu0 0.0
    %1313 = vmatpush1.xpose.msra.mxu0 0.0
    %1314 = vmatprep.subr.mxu0 0.0
    %1315 = vmatpush1.xpose.msra.mxu0 0.0
    %1316 = vmatprep.subr.mxu0 0.0
    %1317 = vmatpush1.xpose.msra.mxu0 0.0
    %1318 = vmatprep.subr.mxu0 0.0
    %1319 = vmatpush1.xpose.msra.mxu0 0.0
    %1320 = vmatprep.subr.mxu0 0.0
    %1321 = vmatpush1.xpose.msra.mxu0 0.0
    %1322 = vmatprep.subr.mxu0 0.0
    %1323 = vmatpush1.xpose.msra.mxu0 0.0
    %1324 = vmatprep.subr.mxu0 0.0
    %1325 = vmatpush1.xpose.msra.mxu0 0.0
    %1326 = vmatprep.subr.mxu0 0.0
    %1327 = vmatpush1.xpose.msra.mxu0 0.0
    %1328 = vmatprep.subr.mxu0 0.0
    %1329 = vmatpush1.xpose.msra.mxu0 0.0
    %1330 = vmatprep.subr.mxu0 0.0
    %1331 = vmatpush1.xpose.msra.mxu0 0.0
    %1332 = vmatprep.subr.mxu0 0.0
    %1333 = vmatpush1.xpose.msra.mxu0 0.0
    %1334 = vmatprep.subr.mxu0 0.0
    %1335 = vmatpush1.xpose.msra.mxu0 0.0
    %1336 = vmatprep.subr.mxu0 0.0
    %1337 = vmatpush1.xpose.msra.mxu0 %v1304
    %1338 = vmatprep.subr.mxu0 0.0
    %1339 = vmatpush2.xpose.msra.mxu0 0.0
    %1340 = vmatprep.subr.mxu0 0.0
    %1341 = vmatpush2.xpose.msra.mxu0 0.0
    %1342 = vmatprep.subr.mxu0 0.0
    %1343 = vmatpush2.xpose.msra.mxu0 0.0
    %1344 = vmatprep.subr.mxu0 0.0
    %1345 = vmatpush2.xpose.msra.mxu0 0.0
    %1346 = vmatprep.subr.mxu0 0.0
    %1347 = vmatpush2.xpose.msra.mxu0 0.0
    %1348 = vmatprep.subr.mxu0 0.0
    %1349 = vmatpush2.xpose.msra.mxu0 0.0
    %1350 = vmatprep.subr.mxu0 0.0
    %1351 = vmatpush2.xpose.msra.mxu0 0.0
    %1352 = vmatprep.subr.mxu0 0.0
    %1353 = vmatpush2.xpose.msra.mxu0 0.0
    %1354 = vmatprep.subr.mxu0 0.0
    %1355 = vmatpush2.xpose.msra.mxu0 0.0
    %1356 = vmatprep.subr.mxu0 0.0
    %1357 = vmatpush2.xpose.msra.mxu0 0.0
    %1358 = vmatprep.subr.mxu0 0.0
    %1359 = vmatpush2.xpose.msra.mxu0 0.0
    %1360 = vmatprep.subr.mxu0 0.0
    %1361 = vmatpush2.xpose.msra.mxu0 0.0
    %1362 = vmatprep.subr.mxu0 0.0
    %1363 = vmatpush2.xpose.msra.mxu0 0.0
    %1364 = vmatprep.subr.mxu0 0.0
    %1365 = vmatpush2.xpose.msra.mxu0 0.0
    %1366 = vmatprep.subr.mxu0 0.0
    %1367 = vmatpush2.xpose.msra.mxu0 0.0
    %1368 = vmatprep.subr.mxu0 0.0
    %1369 = vmatpush2.xpose.msra.mxu0 0.0
    %1370 = vmatprep.mubr.f32.mxu0 0.0
    %1371 = vmatmul.mubr.f32.gmra.mxu0 %v1302
    %v1372 = vpop.f32.mrf.mxu0
    %v1373 = vadd.f32 0.0, %v1372
    %v1374 = vpop.f32.mrf.mxu0
    %1375 = vdwg.mxu0
    %v1376 = vmul.f32 %v1295, 0.35355338
    %v1377 = vmul.f32 %v1373, 0.35355338
    %v1378 = vsel %vm228, %v1376, -inf
    %1379 = vmax.xlane.f32.xlu0 %v1378
    %v1380 = vpop.xlane.xlu0 %1379
    %v1381 = vsel %vm228, %v1377, -inf
    %1382 = vmax.xlane.f32.xlu0 %v1381
    %v1383 = vpop.xlane.xlu0 %1382
    %v1384 = vsub.f32 %v1376, %v1380
    %v1385 = vsub.f32 %v1377, %v1383
    %v1386 = vmul.f32 %v1384, 1.442695
    %v1387 = vpow.pop %v1386
    %v1388 = vmul.f32 %v1385, 1.442695
    %v1389 = vpow.pop %v1388
    %v1390 = vsel %vm228, %v1387, 0.0
    %1391 = vadd.xlane.f32.xlu0 %v1390
    %v1392 = vpop.xlane.xlu0 %1391
    %v1393 = vsel %vm228, %v1389, 0.0
    %1394 = vadd.xlane.f32.xlu0 %v1393
    %v1395 = vpop.xlane.xlu0 %1394
    %v1396 = vrcp.pop %v1392
    %v1397 = vrcp.pop %v1395
    %v1398 = vmul.f32 %v1387, %v1396
    %v1399 = vmul.f32 %v1389, %v1397
    %1400 = vrot.lane.b32.xlu0 %v149, 40
    %v1401 = vpop.permute.xlu0 %1400
    %v1404 = vsel %vm228, %v1398, 0
    %1406 = vmatprep.subr.mxu0 0.0
    %1407 = vmatpush1.msra.mxu0 0.0
    %1408 = vmatprep.subr.mxu0 0.0
    %1409 = vmatpush1.msra.mxu0 0.0
    %1410 = vmatprep.subr.mxu0 0.0
    %1411 = vmatpush1.msra.mxu0 0.0
    %1412 = vmatprep.subr.mxu0 0.0
    %1413 = vmatpush1.msra.mxu0 0.0
    %1414 = vmatprep.subr.mxu0 0.0
    %1415 = vmatpush1.msra.mxu0 0.0
    %1416 = vmatprep.subr.mxu0 0.0
    %1417 = vmatpush1.msra.mxu0 0.0
    %1418 = vmatprep.subr.mxu0 0.0
    %1419 = vmatpush1.msra.mxu0 0.0
    %1420 = vmatprep.subr.mxu0 0.0
    %1421 = vmatpush1.msra.mxu0 0.0
    %1422 = vmatprep.subr.mxu0 0.0
    %1423 = vmatpush1.msra.mxu0 0.0
    %1424 = vmatprep.subr.mxu0 0.0
    %1425 = vmatpush1.msra.mxu0 0.0
    %1426 = vmatprep.subr.mxu0 0.0
    %1427 = vmatpush1.msra.mxu0 0.0
    %1428 = vmatprep.subr.mxu0 0.0
    %1429 = vmatpush1.msra.mxu0 0.0
    %1430 = vmatprep.subr.mxu0 0.0
    %1431 = vmatpush1.msra.mxu0 0.0
    %1432 = vmatprep.subr.mxu0 0.0
    %1433 = vmatpush1.msra.mxu0 0.0
    %1434 = vmatprep.subr.mxu0 0.0
    %1435 = vmatpush1.msra.mxu0 0.0
    %1436 = vmatprep.subr.mxu0 0.0
    %1437 = vmatpush1.msra.mxu0 %v1401
    %1438 = vmatprep.subr.mxu0 0.0
    %1439 = vmatpush2.msra.mxu0 0.0
    %1440 = vmatprep.subr.mxu0 0.0
    %1441 = vmatpush2.msra.mxu0 0.0
    %1442 = vmatprep.subr.mxu0 0.0
    %1443 = vmatpush2.msra.mxu0 0.0
    %1444 = vmatprep.subr.mxu0 0.0
    %1445 = vmatpush2.msra.mxu0 0.0
    %1446 = vmatprep.subr.mxu0 0.0
    %1447 = vmatpush2.msra.mxu0 0.0
    %1448 = vmatprep.subr.mxu0 0.0
    %1449 = vmatpush2.msra.mxu0 0.0
    %1450 = vmatprep.subr.mxu0 0.0
    %1451 = vmatpush2.msra.mxu0 0.0
    %1452 = vmatprep.subr.mxu0 0.0
    %1453 = vmatpush2.msra.mxu0 0.0
    %1454 = vmatprep.subr.mxu0 0.0
    %1455 = vmatpush2.msra.mxu0 0.0
    %1456 = vmatprep.subr.mxu0 0.0
    %1457 = vmatpush2.msra.mxu0 0.0
    %1458 = vmatprep.subr.mxu0 0.0
    %1459 = vmatpush2.msra.mxu0 0.0
    %1460 = vmatprep.subr.mxu0 0.0
    %1461 = vmatpush2.msra.mxu0 0.0
    %1462 = vmatprep.subr.mxu0 0.0
    %1463 = vmatpush2.msra.mxu0 0.0
    %1464 = vmatprep.subr.mxu0 0.0
    %1465 = vmatpush2.msra.mxu0 0.0
    %1466 = vmatprep.subr.mxu0 0.0
    %1467 = vmatpush2.msra.mxu0 0.0
    %1468 = vmatprep.subr.mxu0 0.0
    %1469 = vmatpush2.msra.mxu0 0.0
    %1470 = vmatprep.mubr.f32.mxu0 0.0
    %1471 = vmatmul.mubr.f32.gmra.mxu0 %v1404
    %v1472 = vpop.f32.mrf.mxu0
    %v1473 = vadd.f32 0.0, %v1472
    %v1474 = vpop.f32.mrf.mxu0
    %1475 = vdwg.mxu0
    %1476 = vrot.lane.b32.xlu0 %v222, 40
    %v1477 = vpop.permute.xlu0 %1476
    %v1480 = vsel %vm228, %v1399, 0
    %1482 = vmatprep.subr.mxu0 0.0
    %1483 = vmatpush1.msra.mxu0 0.0
    %1484 = vmatprep.subr.mxu0 0.0
    %1485 = vmatpush1.msra.mxu0 0.0
    %1486 = vmatprep.subr.mxu0 0.0
    %1487 = vmatpush1.msra.mxu0 0.0
    %1488 = vmatprep.subr.mxu0 0.0
    %1489 = vmatpush1.msra.mxu0 0.0
    %1490 = vmatprep.subr.mxu0 0.0
    %1491 = vmatpush1.msra.mxu0 0.0
    %1492 = vmatprep.subr.mxu0 0.0
    %1493 = vmatpush1.msra.mxu0 0.0
    %1494 = vmatprep.subr.mxu0 0.0
    %1495 = vmatpush1.msra.mxu0 0.0
    %1496 = vmatprep.subr.mxu0 0.0
    %1497 = vmatpush1.msra.mxu0 0.0
    %1498 = vmatprep.subr.mxu0 0.0
    %1499 = vmatpush1.msra.mxu0 0.0
    %1500 = vmatprep.subr.mxu0 0.0
    %1501 = vmatpush1.msra.mxu0 0.0
    %1502 = vmatprep.subr.mxu0 0.0
    %1503 = vmatpush1.msra.mxu0 0.0
    %1504 = vmatprep.subr.mxu0 0.0
    %1505 = vmatpush1.msra.mxu0 0.0
    %1506 = vmatprep.subr.mxu0 0.0
    %1507 = vmatpush1.msra.mxu0 0.0
    %1508 = vmatprep.subr.mxu0 0.0
    %1509 = vmatpush1.msra.mxu0 0.0
    %1510 = vmatprep.subr.mxu0 0.0
    %1511 = vmatpush1.msra.mxu0 0.0
    %1512 = vmatprep.subr.mxu0 0.0
    %1513 = vmatpush1.msra.mxu0 %v1477
    %1514 = vmatprep.subr.mxu0 0.0
    %1515 = vmatpush2.msra.mxu0 0.0
    %1516 = vmatprep.subr.mxu0 0.0
    %1517 = vmatpush2.msra.mxu0 0.0
    %1518 = vmatprep.subr.mxu0 0.0
    %1519 = vmatpush2.msra.mxu0 0.0
    %1520 = vmatprep.subr.mxu0 0.0
    %1521 = vmatpush2.msra.mxu0 0.0
    %1522 = vmatprep.subr.mxu0 0.0
    %1523 = vmatpush2.msra.mxu0 0.0
    %1524 = vmatprep.subr.mxu0 0.0
    %1525 = vmatpush2.msra.mxu0 0.0
    %1526 = vmatprep.subr.mxu0 0.0
    %1527 = vmatpush2.msra.mxu0 0.0
    %1528 = vmatprep.subr.mxu0 0.0
    %1529 = vmatpush2.msra.mxu0 0.0
    %1530 = vmatprep.subr.mxu0 0.0
    %1531 = vmatpush2.msra.mxu0 0.0
    %1532 = vmatprep.subr.mxu0 0.0
    %1533 = vmatpush2.msra.mxu0 0.0
    %1534 = vmatprep.subr.mxu0 0.0
    %1535 = vmatpush2.msra.mxu0 0.0
    %1536 = vmatprep.subr.mxu0 0.0
    %1537 = vmatpush2.msra.mxu0 0.0
    %1538 = vmatprep.subr.mxu0 0.0
    %1539 = vmatpush2.msra.mxu0 0.0
    %1540 = vmatprep.subr.mxu0 0.0
    %1541 = vmatpush2.msra.mxu0 0.0
    %1542 = vmatprep.subr.mxu0 0.0
    %1543 = vmatpush2.msra.mxu0 0.0
    %1544 = vmatprep.subr.mxu0 0.0
    %1545 = vmatpush2.msra.mxu0 0.0
    %1546 = vmatprep.mubr.f32.mxu0 0.0
    %1547 = vmatmul.mubr.f32.gmra.mxu0 %v1480
    %v1548 = vpop.f32.mrf.mxu0
    %v1549 = vadd.f32 0.0, %v1548
    %v1550 = vpop.f32.mrf.mxu0
    %1551 = vdwg.mxu0
    %1554 = vrot.lane.b32.xlu0 %v809, 8
    %v1555 = vpop.permute.xlu0 %1554
    %1556 = vrot.lane.b32.xlu0 %v885, 8
    %v1557 = vpop.permute.xlu0 %1556
    %1562 = vrot.lane.b32.xlu0 %v1141, 16
    %v1563 = vpop.permute.xlu0 %1562
    %1564 = vrot.lane.b32.xlu0 %v1217, 16
    %v1565 = vpop.permute.xlu0 %1564
    %1570 = vrot.lane.b32.xlu0 %v1473, 24
    %v1571 = vpop.permute.xlu0 %1570
    %1572 = vrot.lane.b32.xlu0 %v1549, 24
    %v1573 = vpop.permute.xlu0 %1572
    %v1576 = vsel %vm228, %v477, %v1555
    %v1577 = vsel %vm228, %v553, %v1557
    %vm1578 = vcmask 130048
    %v1579 = vsel %vm1578, %v1576, %v1563
    %v1580 = vsel %vm1578, %v1577, %v1565
    %vm1581 = vcmask 195584
    %v1582 = vsel %vm1581, %v1579, %v1571
    %v1583 = vsel %vm1581, %v1580, %v1573
    %v1584 = vld [vmem:[#allocation7] sm:$0xff]
    %v1585 = vld [vmem:[#allocation7 + $0x8] sm:$0xff]
    %v1586 = vld [vmem:[#allocation7 + $0x10] sm:$0xff]
    %v1587 = vld [vmem:[#allocation7 + $0x18] sm:$0xff]
    %v1588 = vld [vmem:[#allocation7 + $0x20] sm:$0xff]
    %v1589 = vld [vmem:[#allocation7 + $0x28] sm:$0xff]
    %v1590 = vld [vmem:[#allocation7 + $0x30] sm:$0xff]
    %v1591 = vld [vmem:[#allocation7 + $0x38] sm:$0xff]
    %v1593 = vsel %vm78, %v1582, 0
    %1595 = vmatprep.subr.mxu0 0.0
    %1596 = vmatpush1.msra.mxu0 0.0
    %1597 = vmatprep.subr.mxu0 0.0
    %1598 = vmatpush1.msra.mxu0 0.0
    %1599 = vmatprep.subr.mxu0 0.0
    %1600 = vmatpush1.msra.mxu0 0.0
    %1601 = vmatprep.subr.mxu0 0.0
    %1602 = vmatpush1.msra.mxu0 0.0
    %1603 = vmatprep.subr.mxu0 0.0
    %1604 = vmatpush1.msra.mxu0 0.0
    %1605 = vmatprep.subr.mxu0 0.0
    %1606 = vmatpush1.msra.mxu0 0.0
    %1607 = vmatprep.subr.mxu0 0.0
    %1608 = vmatpush1.msra.mxu0 0.0
    %1609 = vmatprep.subr.mxu0 0.0
    %1610 = vmatpush1.msra.mxu0 0.0
    %1611 = vmatprep.subr.mxu0 0.0
    %1612 = vmatpush1.msra.mxu0 0.0
    %1613 = vmatprep.subr.mxu0 0.0
    %1614 = vmatpush1.msra.mxu0 0.0
    %1615 = vmatprep.subr.mxu0 0.0
    %1616 = vmatpush1.msra.mxu0 0.0
    %1617 = vmatprep.subr.mxu0 0.0
    %1618 = vmatpush1.msra.mxu0 0.0
    %1619 = vmatprep.subr.mxu0 0.0
    %1620 = vmatpush1.msra.mxu0 %v1587
    %1621 = vmatprep.subr.mxu0 0.0
    %1622 = vmatpush1.msra.mxu0 %v1586
    %1623 = vmatprep.subr.mxu0 0.0
    %1624 = vmatpush1.msra.mxu0 %v1585
    %1625 = vmatprep.subr.mxu0 0.0
    %1626 = vmatpush1.msra.mxu0 %v1584
    %1627 = vmatprep.subr.mxu0 0.0
    %1628 = vmatpush2.msra.mxu0 0.0
    %1629 = vmatprep.subr.mxu0 0.0
    %1630 = vmatpush2.msra.mxu0 0.0
    %1631 = vmatprep.subr.mxu0 0.0
    %1632 = vmatpush2.msra.mxu0 0.0
    %1633 = vmatprep.subr.mxu0 0.0
    %1634 = vmatpush2.msra.mxu0 0.0
    %1635 = vmatprep.subr.mxu0 0.0
    %1636 = vmatpush2.msra.mxu0 0.0
    %1637 = vmatprep.subr.mxu0 0.0
    %1638 = vmatpush2.msra.mxu0 0.0
    %1639 = vmatprep.subr.mxu0 0.0
    %1640 = vmatpush2.msra.mxu0 0.0
    %1641 = vmatprep.subr.mxu0 0.0
    %1642 = vmatpush2.msra.mxu0 0.0
    %1643 = vmatprep.subr.mxu0 0.0
    %1644 = vmatpush2.msra.mxu0 0.0
    %1645 = vmatprep.subr.mxu0 0.0
    %1646 = vmatpush2.msra.mxu0 0.0
    %1647 = vmatprep.subr.mxu0 0.0
    %1648 = vmatpush2.msra.mxu0 0.0
    %1649 = vmatprep.subr.mxu0 0.0
    %1650 = vmatpush2.msra.mxu0 0.0
    %1651 = vmatprep.subr.mxu0 0.0
    %1652 = vmatpush2.msra.mxu0 0.0
    %1653 = vmatprep.subr.mxu0 0.0
    %1654 = vmatpush2.msra.mxu0 0.0
    %1655 = vmatprep.subr.mxu0 0.0
    %1656 = vmatpush2.msra.mxu0 0.0
    %1657 = vmatprep.subr.mxu0 0.0
    %1658 = vmatpush2.msra.mxu0 0.0
    %1659 = vmatprep.mubr.f32.mxu0 0.0
    %1660 = vmatmul.mubr.f32.gmra.mxu0 %v1593
    %v1661 = vpop.f32.mrf.mxu0
    %v1662 = vadd.f32 %v68, %v1661
    %v1663 = vpop.f32.mrf.mxu0
    %1664 = vdwg.mxu0
    %v1666 = vsel %vm78, %v1583, 0
    %1668 = vmatprep.subr.mxu0 0.0
    %1669 = vmatpush1.msra.mxu0 0.0
    %1670 = vmatprep.subr.mxu0 0.0
    %1671 = vmatpush1.msra.mxu0 0.0
    %1672 = vmatprep.subr.mxu0 0.0
    %1673 = vmatpush1.msra.mxu0 0.0
    %1674 = vmatprep.subr.mxu0 0.0
    %1675 = vmatpush1.msra.mxu0 0.0
    %1676 = vmatprep.subr.mxu0 0.0
    %1677 = vmatpush1.msra.mxu0 0.0
    %1678 = vmatprep.subr.mxu0 0.0
    %1679 = vmatpush1.msra.mxu0 0.0
    %1680 = vmatprep.subr.mxu0 0.0
    %1681 = vmatpush1.msra.mxu0 0.0
    %1682 = vmatprep.subr.mxu0 0.0
    %1683 = vmatpush1.msra.mxu0 0.0
    %1684 = vmatprep.subr.mxu0 0.0
    %1685 = vmatpush1.msra.mxu0 0.0
    %1686 = vmatprep.subr.mxu0 0.0
    %1687 = vmatpush1.msra.mxu0 0.0
    %1688 = vmatprep.subr.mxu0 0.0
    %1689 = vmatpush1.msra.mxu0 0.0
    %1690 = vmatprep.subr.mxu0 0.0
    %1691 = vmatpush1.msra.mxu0 0.0
    %1692 = vmatprep.subr.mxu0 0.0
    %1693 = vmatpush1.msra.mxu0 %v1591
    %1694 = vmatprep.subr.mxu0 0.0
    %1695 = vmatpush1.msra.mxu0 %v1590
    %1696 = vmatprep.subr.mxu0 0.0
    %1697 = vmatpush1.msra.mxu0 %v1589
    %1698 = vmatprep.subr.mxu0 0.0
    %1699 = vmatpush1.msra.mxu0 %v1588
    %1700 = vmatprep.subr.mxu0 0.0
    %1701 = vmatpush2.msra.mxu0 0.0
    %1702 = vmatprep.subr.mxu0 0.0
    %1703 = vmatpush2.msra.mxu0 0.0
    %1704 = vmatprep.subr.mxu0 0.0
    %1705 = vmatpush2.msra.mxu0 0.0
    %1706 = vmatprep.subr.mxu0 0.0
    %1707 = vmatpush2.msra.mxu0 0.0
    %1708 = vmatprep.subr.mxu0 0.0
    %1709 = vmatpush2.msra.mxu0 0.0
    %1710 = vmatprep.subr.mxu0 0.0
    %1711 = vmatpush2.msra.mxu0 0.0
    %1712 = vmatprep.subr.mxu0 0.0
    %1713 = vmatpush2.msra.mxu0 0.0
    %1714 = vmatprep.subr.mxu0 0.0
    %1715 = vmatpush2.msra.mxu0 0.0
    %1716 = vmatprep.subr.mxu0 0.0
    %1717 = vmatpush2.msra.mxu0 0.0
    %1718 = vmatprep.subr.mxu0 0.0
    %1719 = vmatpush2.msra.mxu0 0.0
    %1720 = vmatprep.subr.mxu0 0.0
    %1721 = vmatpush2.msra.mxu0 0.0
    %1722 = vmatprep.subr.mxu0 0.0
    %1723 = vmatpush2.msra.mxu0 0.0
    %1724 = vmatprep.subr.mxu0 0.0
    %1725 = vmatpush2.msra.mxu0 0.0
    %1726 = vmatprep.subr.mxu0 0.0
    %1727 = vmatpush2.msra.mxu0 0.0
    %1728 = vmatprep.subr.mxu0 0.0
    %1729 = vmatpush2.msra.mxu0 0.0
    %1730 = vmatprep.subr.mxu0 0.0
    %1731 = vmatpush2.msra.mxu0 0.0
    %1732 = vmatprep.mubr.f32.mxu0 0.0
    %1733 = vmatmul.mubr.f32.gmra.mxu0 %v1666
    %v1734 = vpop.f32.mrf.mxu0
    %v1735 = vadd.f32 %v69, %v1734
    %v1736 = vpop.f32.mrf.mxu0
    %1737 = vdwg.mxu0
    %v1738 = vld [vmem:[%s3] sm:$0x1]
    %v1739 = vld [vmem:[%s4] sm:$0x1]
    %v1740 = vsel %vm78, %v1662, 0.0
    %1741 = vadd.xlane.f32.xlu0 %v1740
    %v1742 = vpop.xlane.xlu0 %1741
    %v1743 = vsel %vm78, %v1735, 0.0
    %1744 = vadd.xlane.f32.xlu0 %v1743
    %v1745 = vpop.xlane.xlu0 %1744
    %v1746 = vrcp.pop 32.0
    %v1747 = vmul.f32 %v1742, %v1746
    %v1748 = vmul.f32 %v1745, %v1746
    %v1749 = vsub.f32 %v1662, %v1747
    %v1750 = vsub.f32 %v1735, %v1748
    %v1751 = vmul.f32 %v1749, %v1749
    %v1752 = vmul.f32 %v1750, %v1750
    %v1753 = vsel %vm78, %v1751, 0.0
    %1754 = vadd.xlane.f32.xlu0 %v1753
    %v1755 = vpop.xlane.xlu0 %1754
    %v1756 = vsel %vm78, %v1752, 0.0
    %1757 = vadd.xlane.f32.xlu0 %v1756
    %v1758 = vpop.xlane.xlu0 %1757
    %v1759 = vmul.f32 %v1755, %v1746
    %v1760 = vmul.f32 %v1758, %v1746
    %v1761 = vadd.f32 %v1759, 1e-12
    %v1762 = vadd.f32 %v1760, 1e-12
    %v1763 = vrsqrt.pop %v1761
    %v1764 = vrsqrt.pop %v1762
    %v1765 = vmul.f32 %v1749, %v1763
    %v1766 = vmul.f32 %v1750, %v1764
    %v1768 = vlaneseq
    %v1769 = vshrl.u32 %v1768, 7
    %v1770 = vsub.s32 0, %v1769
    %v1771 = vrot.slane %v1738, %v1770
    %v1773 = vmul.f32 %v1765, %v1771
    %v1774 = vmul.f32 %v1766, %v1771
    %v1776 = vlaneseq
    %v1777 = vshrl.u32 %v1776, 7
    %v1778 = vsub.s32 0, %v1777
    %v1779 = vrot.slane %v1739, %v1778
    %v1781 = vadd.f32 %v1773, %v1779
    %v1782 = vadd.f32 %v1774, %v1779
    %v1783 = vadd.f32 %v1781, %v68
    %v1784 = vadd.f32 %v1782, %v69
    %v1785 = vld [vmem:[%s5] sm:$0x1]
    %v1786 = vld [vmem:[%s6] sm:$0x1]
    %v1787 = vsel %vm78, %v1783, 0.0
    %1788 = vadd.xlane.f32.xlu0 %v1787
    %v1789 = vpop.xlane.xlu0 %1788
    %v1790 = vsel %vm78, %v1784, 0.0
    %1791 = vadd.xlane.f32.xlu0 %v1790
    %v1792 = vpop.xlane.xlu0 %1791
    %v1793 = vmul.f32 %v1789, %v1746
    %v1794 = vmul.f32 %v1792, %v1746
    %v1795 = vsub.f32 %v1783, %v1793
    %v1796 = vsub.f32 %v1784, %v1794
    %v1797 = vmul.f32 %v1795, %v1795
    %v1798 = vmul.f32 %v1796, %v1796
    %v1799 = vsel %vm78, %v1797, 0.0
    %1800 = vadd.xlane.f32.xlu0 %v1799
    %v1801 = vpop.xlane.xlu0 %1800
    %v1802 = vsel %vm78, %v1798, 0.0
    %1803 = vadd.xlane.f32.xlu0 %v1802
    %v1804 = vpop.xlane.xlu0 %1803
    %v1805 = vmul.f32 %v1801, %v1746
    %v1806 = vmul.f32 %v1804, %v1746
    %v1807 = vadd.f32 %v1805, 1e-12
    %v1808 = vadd.f32 %v1806, 1e-12
    %v1809 = vrsqrt.pop %v1807
    %v1810 = vrsqrt.pop %v1808
    %v1811 = vmul.f32 %v1795, %v1809
    %v1812 = vmul.f32 %v1796, %v1810
    %v1814 = vlaneseq
    %v1815 = vshrl.u32 %v1814, 7
    %v1816 = vsub.s32 0, %v1815
    %v1817 = vrot.slane %v1785, %v1816
    %v1819 = vmul.f32 %v1811, %v1817
    %v1820 = vmul.f32 %v1812, %v1817
    %v1822 = vlaneseq
    %v1823 = vshrl.u32 %v1822, 7
    %v1824 = vsub.s32 0, %v1823
    %v1825 = vrot.slane %v1786, %v1824
    %v1827 = vadd.f32 %v1819, %v1825
    %v1828 = vadd.f32 %v1820, %v1825
    %1829 = vst.msk [vmem:[#allocation8] sm:$0xff] %vm78, %v1827
    %1830 = vst.msk [vmem:[#allocation8 + $0x8] sm:$0xff] %vm78, %v1828
    // Predicated region
    $region42: #{tpu_custom_call.1} parent=1 // pred_check
      _
    $region43: #{tpu_custom_call.1} parent=1 // pred_check_branch
      %1832 = sbr.rel (0) target = $region45
    $region44: #{tpu_custom_call.1} parent=1 // pred_region
      %s1834 = ssub.s32 256, 256
      %1835 = vsyncadd [#allocation4], %s1834
      %s1836 = sshll.u32 [#allocation8], 4
      %s1837 = int_to_ptr.vmem [resolvable:$true] %s1836
      %1842 = dma.vmem_to_hbm [thread:$0]  %s1837, 256, %s7, [#allocation4], 128, 128, 8
    $region45: #{tpu_custom_call.1} parent=1 // pred_fallthru
      _
    // Predicated region
    $region46: #{tpu_custom_call.1} parent=1 // pred_check
      _
    $region47: #{tpu_custom_call.1} parent=1 // pred_check_branch
      %1844 = sbr.rel (0) target = $region49
    $region48: #{tpu_custom_call.1} parent=1 // pred_region
      %1845 = dma.done [#allocation4], 256
    $region49: #{tpu_custom_call.1} parent=1 // pred_fallthru
      _
    %1846 = vsyncpa [#allocation3], 1
    %1847 = vsyncpa [#allocation6], 1
    %1848 = vsyncpa [#allocation4], 1

</llo_original>
